<compile_context>
chip_gen: v5e
topology: v5e:2x2
jax: 0.10.0
libtpu: 0.0.40
codegen_flags: <defaults>
</compile_context>

<pallas_src>
import jax
import jax.numpy as jnp
from jax.experimental import pallas as pl
from jax.experimental.pallas import tpu as pltpu

LANE = 128
SUBLANE_BF16 = 16   # bf16 packs 16 rows per sublane group


def _round_up(n, m):
    return ((n + m - 1) // m) * m


def _tpu_vmem_bytes():
    """Physical VMEM per TensorCore; falls back to the v7x value (most restrictive)."""
    try:
        return int(getattr(pltpu.get_tpu_info(), "vmem_capacity_bytes", 64 << 20))
    except Exception:
        return 64 << 20


# --------------------------------------------------------------------------------------
# Kernel
# --------------------------------------------------------------------------------------
def vae_fwd_kernel(x_ref, we1_ref, be1_ref, wml_ref, bml_ref,
                   eps_ref, wd1_ref, bd1_ref, wd2_ref, bd2_ref,
                   recon_ref, musig_ref):
    Lp = eps_ref.shape[-1]

    x = x_ref[...]                                                        # bf16 [TB, Dp]

    # ---- encoder hidden: relu(x @ We1 + be1) ----
    h = jnp.dot(x, we1_ref[...], preferred_element_type=jnp.float32) + be1_ref[...]
    h = jnp.maximum(h, 0.0).astype(jnp.bfloat16)

    # ---- fused mu | log_sigma projection: one [TB, 2*Lp] matmul ----
    ml = jnp.dot(h, wml_ref[...], preferred_element_type=jnp.float32) + bml_ref[...]
    mu = ml[:, :Lp]
    sigma = jnp.exp(ml[:, Lp:])                                           # f32 on EUP

    # ---- reparameterization: z = mu + sigma * eps (f32) ----
    z = mu + sigma * eps_ref[...]
    zb = z.astype(jnp.bfloat16)

    # ---- decoder ----
    hd = jnp.dot(zb, wd1_ref[...], preferred_element_type=jnp.float32) + bd1_ref[...]
    hd = jnp.maximum(hd, 0.0).astype(jnp.bfloat16)
    logits = jnp.dot(hd, wd2_ref[...], preferred_element_type=jnp.float32) + bd2_ref[...]
    # sigmoid(x) == 0.5*(tanh(x/2)+1): keeps the widest elementwise op on the EUP slot
    recon = 0.5 * (jnp.tanh(0.5 * logits) + 1.0)

    recon_ref[...] = recon.astype(recon_ref.dtype)
    # fused mu | sigma output (two lane-aligned stores into one stream)
    musig_ref[:, :Lp] = mu.astype(musig_ref.dtype)
    musig_ref[:, Lp:] = sigma.astype(musig_ref.dtype)


# --------------------------------------------------------------------------------------
# One-time weight preparation (hoisted out of the per-call hot path)
# --------------------------------------------------------------------------------------
def prepare_params(params):
    D_in, H = params["We1"].shape
    L = params["Wmu"].shape[1]
    Dp, Hp, Lp = _round_up(D_in, LANE), _round_up(H, LANE), _round_up(L, LANE)

    def pad2(a, r, c, dtype):
        a = jnp.asarray(a, dtype)
        return jnp.pad(a, ((0, r - a.shape[0]), (0, c - a.shape[1])))

    return {
        "dims": (D_in, H, L, Dp, Hp, Lp),
        "We1": pad2(params["We1"], Dp, Hp, jnp.bfloat16),
        "be1": pad2(params["be1"], 1, Hp, jnp.float32),
        "Wml": jnp.concatenate([pad2(params["Wmu"], Hp, Lp, jnp.bfloat16),
                                pad2(params["Wls"], Hp, Lp, jnp.bfloat16)], axis=1),
        "bml": jnp.concatenate([pad2(params["bmu"], 1, Lp, jnp.float32),
                                pad2(params["bls"], 1, Lp, jnp.float32)], axis=1),
        "Wd1": pad2(params["Wd1"], Lp, Hp, jnp.bfloat16),
        "bd1": pad2(params["bd1"], 1, Hp, jnp.float32),
        "Wd2": pad2(params["Wd2"], Hp, Dp, jnp.bfloat16),
        "bd2": pad2(params["bd2"], 1, Dp, jnp.float32),
    }


# --------------------------------------------------------------------------------------
# Wrapper
# --------------------------------------------------------------------------------------
def vae_forward(x, eps, prep):
    """Fused VAE forward. x: [B, D_in] f32, eps: [B, L] f32, prep: prepare_params(...) output.
    Returns (recon, mu, sigma) in f32."""
    D_in, H, L, Dp, Hp, Lp = prep["dims"]
    B = x.shape[0]
    assert x.shape == (B, D_in) and eps.shape == (B, L)

    # ---- generation-aware batch tile + VMEM cap ----
    vmem_phys = _tpu_vmem_bytes()
    big_vmem = vmem_phys > (64 << 20)          # v5e/v6e: 128 MiB/TC; v7x: 64 MiB/TC
    cap = (100 << 20) if big_vmem else (44 << 20)

    if B < 256:
        TB = _round_up(B, SUBLANE_BF16)        # bf16 sublane packing
    elif big_vmem and B >= 512:
        TB = 512
    else:
        TB = 256
    Bp = _round_up(B, TB)
    grid = (Bp // TB,)

    # ---- pad x / eps only when needed (fast path for aligned shapes) ----
    xp = x.astype(jnp.bfloat16)
    if (Bp, Dp) != (B, D_in):
        xp = jnp.pad(xp, ((0, Bp - B), (0, Dp - D_in)))
    epsp = eps.astype(jnp.float32)
    if (Bp, Lp) != (B, L):
        epsp = jnp.pad(epsp, ((0, Bp - B), (0, Lp - L)))

    weight_bytes = int(
        (prep["We1"].size + prep["Wml"].size + prep["Wd1"].size + prep["Wd2"].size) * 2
        + (prep["be1"].size + prep["bml"].size + prep["bd1"].size + prep["bd2"].size) * 4)

    if weight_bytes > 0.6 * cap:
        # TODO(synk): switch to an Hp-tiled (grid-over-hidden, accumulator) variant here.
        pass

    flops = 2 * Bp * (Dp * Hp + Hp * 2 * Lp + Lp * Hp + Hp * Dp)
    transcendentals = Bp * (Lp + Dp)
    bytes_accessed = int(Bp * Dp * 2 + Bp * Lp * 4 + weight_bytes
                         + Bp * Dp * 4 + Bp * 2 * Lp * 4)

    def run(single_buffer_weights):
        wbuf = 1 if single_buffer_weights else 2
        # precise VMEM budget: resident weights x buffer_count + double-buffered streamed tiles
        # + f32 intermediates (h, ml, hd, logits ~ TB*(2Hp + 2Lp + Dp)*4 B), +20% headroom.
        in_tile = TB * Dp * 2 + TB * Lp * 4
        out_tile = TB * Dp * 4 + TB * 2 * Lp * 4
        interm = TB * (2 * Hp + 2 * Lp + Dp) * 4
        need = weight_bytes * wbuf + 2 * (in_tile + out_tile) + interm
        vmem_limit = int(min(max(int(need * 1.2), 8 << 20), cap))

        batch_spec = lambda cols: pl.BlockSpec((TB, cols), lambda i: (i, 0))
        if single_buffer_weights:
            const_spec = lambda shape: pl.BlockSpec(shape, lambda i: (0, 0),
                                                    pipeline_mode=pl.Buffered(1))
        else:
            const_spec = lambda shape: pl.BlockSpec(shape, lambda i: (0, 0))

        in_specs = [
            batch_spec(Dp),                                     # x
            const_spec((Dp, Hp)), const_spec((1, Hp)),          # We1, be1
            const_spec((Hp, 2 * Lp)), const_spec((1, 2 * Lp)),  # fused Wmu|Wls, bmu|bls
            batch_spec(Lp),                                     # eps
            const_spec((Lp, Hp)), const_spec((1, Hp)),          # Wd1, bd1
            const_spec((Hp, Dp)), const_spec((1, Dp)),          # Wd2, bd2
        ]
        out_specs = (batch_spec(Dp), batch_spec(2 * Lp))

        return pl.pallas_call(
            vae_fwd_kernel,
            out_shape=(jax.ShapeDtypeStruct((Bp, Dp), jnp.float32),        # decoder(z)
                       jax.ShapeDtypeStruct((Bp, 2 * Lp), jnp.float32)),   # mu | sigma fused
            grid=grid,
            in_specs=in_specs,
            out_specs=out_specs,
            compiler_params=pltpu.CompilerParams(
                dimension_semantics=("parallel",),
                vmem_limit_bytes=vmem_limit),
            cost_estimate=pl.CostEstimate(flops=flops,
                                          transcendentals=transcendentals,
                                          bytes_accessed=bytes_accessed),
        )(xp, prep["We1"], prep["be1"], prep["Wml"], prep["bml"],
          epsp, prep["Wd1"], prep["bd1"], prep["Wd2"], prep["bd2"])

    try:
        recon_p, musig_p = run(single_buffer_weights=True)
    except Exception:
        # pipeline_mode=Buffered(1) unsupported on this JAX build -> default double-buffering
        recon_p, musig_p = run(single_buffer_weights=False)

    # ---- strip padding (no-op slices when already aligned) ----
    recon = recon_p if (Bp, Dp) == (B, D_in) else recon_p[:B, :D_in]
    mu = musig_p[:B, :L]
    sigma = musig_p[:B, Lp:Lp + L]
    return recon, mu, sigma


# --------------------------------------------------------------------------------------
# Params + pure-JAX reference
# --------------------------------------------------------------------------------------
def init_params(key, d_in, hidden, latent):
    ks = jax.random.split(key, 6)
    sc = 0.1
    return {
        "We1": sc * jax.random.normal(ks[0], (d_in, hidden), jnp.float32),
        "be1": jnp.zeros((1, hidden), jnp.float32),
        "Wmu": sc * jax.random.normal(ks[1], (hidden, latent), jnp.float32),
        "bmu": jnp.zeros((1, latent), jnp.float32),
        "Wls": sc * jax.random.normal(ks[2], (hidden, latent), jnp.float32),
        "bls": jnp.zeros((1, latent), jnp.float32),
        "Wd1": sc * jax.random.normal(ks[3], (latent, hidden), jnp.float32),
        "bd1": jnp.zeros((1, hidden), jnp.float32),
        "Wd2": sc * jax.random.normal(ks[4], (hidden, d_in), jnp.float32),
        "bd2": jnp.zeros((1, d_in), jnp.float32),
    }


def vae_forward_ref(x, eps, p):
    """Plain-JAX reference with matching numerics (bf16 MXU inputs, f32 accumulation)."""
    def mm(a, w):
        return jnp.dot(a.astype(jnp.bfloat16), w.astype(jnp.bfloat16),
                       preferred_element_type=jnp.float32)
    h = jnp.maximum(mm(x, p["We1"]) + p["be1"], 0.0)
    mu = mm(h, p["Wmu"]) + p["bmu"]
    sigma = jnp.exp(mm(h, p["Wls"]) + p["bls"])
    z = mu + sigma * eps
    hd = jnp.maximum(mm(z, p["Wd1"]) + p["bd1"], 0.0)
    recon = jax.nn.sigmoid(mm(hd, p["Wd2"]) + p["bd2"])
    return recon, mu, sigma


if __name__ == "__main__":
    B, D_IN, HIDDEN, LATENT = 4, 32, 64, 16

    key = jax.random.PRNGKey(0)
    k_x, k_eps, k_p = jax.random.split(key, 3)
    x = jax.random.normal(k_x, (B, D_IN), jnp.float32)
    eps = jax.random.normal(k_eps, (B, LATENT), jnp.float32)   # reparameterization noise
    params = init_params(k_p, D_IN, HIDDEN, LATENT)

    prep = prepare_params(params)   # one-time weight pad/cast/fuse (out of the hot path)

    recon, mu, sigma = vae_forward(x, eps, prep)
    jax.block_until_ready((recon, mu, sigma))

    # sanity check against pure-JAX reference (same bf16-in / f32-accumulate numerics)
    r_ref, mu_r, s_r = vae_forward_ref(x, eps, params)
    assert jnp.allclose(recon, r_ref, atol=1e-2, rtol=1e-2), "recon mismatch"
    assert jnp.allclose(mu, mu_r, atol=1e-2, rtol=1e-2), "mu mismatch"
    assert jnp.allclose(sigma, s_r, atol=1e-2, rtol=1e-2), "sigma mismatch"

    print("KERNEL_OK")
</pallas_src>

<mosaic_0001>
module attributes {stable_mosaic.version = 11 : i64} {
  func.func @vae_fwd_kernel(%arg0: i32, %arg1: memref<16x128xbf16, #tpu.memory_space<vmem>>, %arg2: memref<128x128xbf16, #tpu.memory_space<vmem>>, %arg3: memref<1x128xf32, #tpu.memory_space<vmem>>, %arg4: memref<128x256xbf16, #tpu.memory_space<vmem>>, %arg5: memref<1x256xf32, #tpu.memory_space<vmem>>, %arg6: memref<16x128xf32, #tpu.memory_space<vmem>>, %arg7: memref<128x128xbf16, #tpu.memory_space<vmem>>, %arg8: memref<1x128xf32, #tpu.memory_space<vmem>>, %arg9: memref<128x128xbf16, #tpu.memory_space<vmem>>, %arg10: memref<1x128xf32, #tpu.memory_space<vmem>>, %arg11: memref<16x128xf32, #tpu.memory_space<vmem>>, %arg12: memref<16x256xf32, #tpu.memory_space<vmem>>) attributes {dimension_semantics = [#tpu.dimension_semantics<parallel>], iteration_bounds = array<i64: 1>, scalar_prefetch = 0 : i64, scratch_operands = 0 : i64, tpu.core_type = #tpu.core_type<tc>, window_params = [{transform_indices = @transform_0, window_bounds = array<i64: 16, 128>}, {pipeline_mode = #tpu.pipeline_mode<synchronous>, transform_indices = @transform_1, window_bounds = array<i64: 128, 128>}, {pipeline_mode = #tpu.pipeline_mode<synchronous>, transform_indices = @transform_2, window_bounds = array<i64: 1, 128>}, {pipeline_mode = #tpu.pipeline_mode<synchronous>, transform_indices = @transform_3, window_bounds = array<i64: 128, 256>}, {pipeline_mode = #tpu.pipeline_mode<synchronous>, transform_indices = @transform_4, window_bounds = array<i64: 1, 256>}, {transform_indices = @transform_5, window_bounds = array<i64: 16, 128>}, {pipeline_mode = #tpu.pipeline_mode<synchronous>, transform_indices = @transform_6, window_bounds = array<i64: 128, 128>}, {pipeline_mode = #tpu.pipeline_mode<synchronous>, transform_indices = @transform_7, window_bounds = array<i64: 1, 128>}, {pipeline_mode = #tpu.pipeline_mode<synchronous>, transform_indices = @transform_8, window_bounds = array<i64: 128, 128>}, {pipeline_mode = #tpu.pipeline_mode<synchronous>, transform_indices = @transform_9, window_bounds = array<i64: 1, 128>}, {transform_indices = @transform_10, window_bounds = array<i64: 16, 128>}, {transform_indices = @transform_11, window_bounds = array<i64: 16, 256>}]} {
    %c0 = arith.constant 0 : index
    %c0_0 = arith.constant 0 : index
    %0 = vector.load %arg1[%c0, %c0_0] : memref<16x128xbf16, #tpu.memory_space<vmem>>, vector<16x128xbf16>
    %c0_1 = arith.constant 0 : index
    %c0_2 = arith.constant 0 : index
    %1 = vector.load %arg2[%c0_1, %c0_2] : memref<128x128xbf16, #tpu.memory_space<vmem>>, vector<128x128xbf16>
    %cst = arith.constant dense<0.000000e+00> : vector<16x128xf32>
    %2 = tpu.matmul %0, %1, %cst {dimension_numbers = #tpu.dot_dimension_numbers<[1], [0], [0], [1], [0, 0, 1, 1], [], []>} : vector<16x128xbf16>, vector<128x128xbf16>, vector<16x128xf32> -> vector<16x128xf32>
    %c0_3 = arith.constant 0 : index
    %c0_4 = arith.constant 0 : index
    %3 = vector.load %arg3[%c0_3, %c0_4] : memref<1x128xf32, #tpu.memory_space<vmem>>, vector<1x128xf32>
    %4 = vector.broadcast %3 : vector<1x128xf32> to vector<16x128xf32>
    %5 = arith.addf %2, %4 : vector<16x128xf32>
    %cst_5 = arith.constant 0.000000e+00 : f32
    %6 = vector.broadcast %cst_5 : f32 to vector<16x128xf32>
    %7 = arith.maximumf %5, %6 : vector<16x128xf32>
    %8 = arith.truncf %7 : vector<16x128xf32> to vector<16x128xbf16>
    %c0_6 = arith.constant 0 : index
    %c0_7 = arith.constant 0 : index
    %9 = vector.load %arg4[%c0_6, %c0_7] : memref<128x256xbf16, #tpu.memory_space<vmem>>, vector<128x256xbf16>
    %cst_8 = arith.constant dense<0.000000e+00> : vector<16x256xf32>
    %10 = tpu.matmul %8, %9, %cst_8 {dimension_numbers = #tpu.dot_dimension_numbers<[1], [0], [0], [1], [0, 0, 1, 1], [], []>} : vector<16x128xbf16>, vector<128x256xbf16>, vector<16x256xf32> -> vector<16x256xf32>
    %c0_9 = arith.constant 0 : index
    %c0_10 = arith.constant 0 : index
    %11 = vector.load %arg5[%c0_9, %c0_10] : memref<1x256xf32, #tpu.memory_space<vmem>>, vector<1x256xf32>
    %12 = vector.broadcast %11 : vector<1x256xf32> to vector<16x256xf32>
    %13 = arith.addf %10, %12 : vector<16x256xf32>
    %14 = vector.extract_strided_slice %13 {offsets = [0, 0], sizes = [16, 128], strides = [1, 1]} : vector<16x256xf32> to vector<16x128xf32>
    %15 = vector.extract_strided_slice %13 {offsets = [0, 128], sizes = [16, 128], strides = [1, 1]} : vector<16x256xf32> to vector<16x128xf32>
    %16 = math.exp %15 : vector<16x128xf32>
    %c0_11 = arith.constant 0 : index
    %c0_12 = arith.constant 0 : index
    %17 = vector.load %arg6[%c0_11, %c0_12] : memref<16x128xf32, #tpu.memory_space<vmem>>, vector<16x128xf32>
    %18 = arith.mulf %16, %17 : vector<16x128xf32>
    %19 = arith.addf %14, %18 : vector<16x128xf32>
    %20 = arith.truncf %19 : vector<16x128xf32> to vector<16x128xbf16>
    %c0_13 = arith.constant 0 : index
    %c0_14 = arith.constant 0 : index
    %21 = vector.load %arg7[%c0_13, %c0_14] : memref<128x128xbf16, #tpu.memory_space<vmem>>, vector<128x128xbf16>
    %cst_15 = arith.constant dense<0.000000e+00> : vector<16x128xf32>
    %22 = tpu.matmul %20, %21, %cst_15 {dimension_numbers = #tpu.dot_dimension_numbers<[1], [0], [0], [1], [0, 0, 1, 1], [], []>} : vector<16x128xbf16>, vector<128x128xbf16>, vector<16x128xf32> -> vector<16x128xf32>
    %c0_16 = arith.constant 0 : index
    %c0_17 = arith.constant 0 : index
    %23 = vector.load %arg8[%c0_16, %c0_17] : memref<1x128xf32, #tpu.memory_space<vmem>>, vector<1x128xf32>
    %24 = vector.broadcast %23 : vector<1x128xf32> to vector<16x128xf32>
    %25 = arith.addf %22, %24 : vector<16x128xf32>
    %cst_18 = arith.constant 0.000000e+00 : f32
    %26 = vector.broadcast %cst_18 : f32 to vector<16x128xf32>
    %27 = arith.maximumf %25, %26 : vector<16x128xf32>
    %28 = arith.truncf %27 : vector<16x128xf32> to vector<16x128xbf16>
    %c0_19 = arith.constant 0 : index
    %c0_20 = arith.constant 0 : index
    %29 = vector.load %arg9[%c0_19, %c0_20] : memref<128x128xbf16, #tpu.memory_space<vmem>>, vector<128x128xbf16>
    %cst_21 = arith.constant dense<0.000000e+00> : vector<16x128xf32>
    %30 = tpu.matmul %28, %29, %cst_21 {dimension_numbers = #tpu.dot_dimension_numbers<[1], [0], [0], [1], [0, 0, 1, 1], [], []>} : vector<16x128xbf16>, vector<128x128xbf16>, vector<16x128xf32> -> vector<16x128xf32>
    %c0_22 = arith.constant 0 : index
    %c0_23 = arith.constant 0 : index
    %31 = vector.load %arg10[%c0_22, %c0_23] : memref<1x128xf32, #tpu.memory_space<vmem>>, vector<1x128xf32>
    %32 = vector.broadcast %31 : vector<1x128xf32> to vector<16x128xf32>
    %33 = arith.addf %30, %32 : vector<16x128xf32>
    %cst_24 = arith.constant 5.000000e-01 : f32
    %34 = vector.broadcast %cst_24 : f32 to vector<16x128xf32>
    %35 = arith.mulf %34, %33 : vector<16x128xf32>
    %36 = math.tanh %35 : vector<16x128xf32>
    %cst_25 = arith.constant 1.000000e+00 : f32
    %37 = vector.broadcast %cst_25 : f32 to vector<16x128xf32>
    %38 = arith.addf %36, %37 : vector<16x128xf32>
    %cst_26 = arith.constant 5.000000e-01 : f32
    %39 = vector.broadcast %cst_26 : f32 to vector<16x128xf32>
    %40 = arith.mulf %39, %38 : vector<16x128xf32>
    %c0_27 = arith.constant 0 : index
    %c0_28 = arith.constant 0 : index
    %41 = vector.load %arg11[%c0_27, %c0_28] : memref<16x128xf32, #tpu.memory_space<vmem>>, vector<16x128xf32>
    tpu.vector_store %arg11[%c0_27, %c0_28], %40 {strides = array<i32>} : memref<16x128xf32, #tpu.memory_space<vmem>>, vector<16x128xf32>,
    %c0_29 = arith.constant 0 : index
    %c0_30 = arith.constant 0 : index
    %42 = vector.load %arg12[%c0_29, %c0_30] : memref<16x256xf32, #tpu.memory_space<vmem>>, vector<16x128xf32>
    tpu.vector_store %arg12[%c0_29, %c0_30], %14 {strides = array<i32>} : memref<16x256xf32, #tpu.memory_space<vmem>>, vector<16x128xf32>,
    %c0_31 = arith.constant 0 : index
    %c128 = arith.constant 128 : index
    %43 = vector.load %arg12[%c0_31, %c128] : memref<16x256xf32, #tpu.memory_space<vmem>>, vector<16x128xf32>
    tpu.vector_store %arg12[%c0_31, %c128], %16 {strides = array<i32>} : memref<16x256xf32, #tpu.memory_space<vmem>>, vector<16x128xf32>,
    return
  }
  func.func @transform_0(%arg0: i32) -> (i32, i32) {
    %c0_i32 = arith.constant 0 : i32
    %c0_i32_0 = arith.constant 0 : i32
    return %arg0, %c0_i32 : i32, i32
  }
  func.func @transform_1(%arg0: i32) -> (i32, i32) {
    %c0_i32 = arith.constant 0 : i32
    %c0_i32_0 = arith.constant 0 : i32
    %c0_i32_1 = arith.constant 0 : i32
    return %c0_i32, %c0_i32_0 : i32, i32
  }
  func.func @transform_2(%arg0: i32) -> (i32, i32) {
    %c0_i32 = arith.constant 0 : i32
    %c0_i32_0 = arith.constant 0 : i32
    %c0_i32_1 = arith.constant 0 : i32
    return %c0_i32, %c0_i32_0 : i32, i32
  }
  func.func @transform_3(%arg0: i32) -> (i32, i32) {
    %c0_i32 = arith.constant 0 : i32
    %c0_i32_0 = arith.constant 0 : i32
    %c0_i32_1 = arith.constant 0 : i32
    return %c0_i32, %c0_i32_0 : i32, i32
  }
  func.func @transform_4(%arg0: i32) -> (i32, i32) {
    %c0_i32 = arith.constant 0 : i32
    %c0_i32_0 = arith.constant 0 : i32
    %c0_i32_1 = arith.constant 0 : i32
    return %c0_i32, %c0_i32_0 : i32, i32
  }
  func.func @transform_5(%arg0: i32) -> (i32, i32) {
    %c0_i32 = arith.constant 0 : i32
    %c0_i32_0 = arith.constant 0 : i32
    return %arg0, %c0_i32 : i32, i32
  }
  func.func @transform_6(%arg0: i32) -> (i32, i32) {
    %c0_i32 = arith.constant 0 : i32
    %c0_i32_0 = arith.constant 0 : i32
    %c0_i32_1 = arith.constant 0 : i32
    return %c0_i32, %c0_i32_0 : i32, i32
  }
  func.func @transform_7(%arg0: i32) -> (i32, i32) {
    %c0_i32 = arith.constant 0 : i32
    %c0_i32_0 = arith.constant 0 : i32
    %c0_i32_1 = arith.constant 0 : i32
    return %c0_i32, %c0_i32_0 : i32, i32
  }
  func.func @transform_8(%arg0: i32) -> (i32, i32) {
    %c0_i32 = arith.constant 0 : i32
    %c0_i32_0 = arith.constant 0 : i32
    %c0_i32_1 = arith.constant 0 : i32
    return %c0_i32, %c0_i32_0 : i32, i32
  }
  func.func @transform_9(%arg0: i32) -> (i32, i32) {
    %c0_i32 = arith.constant 0 : i32
    %c0_i32_0 = arith.constant 0 : i32
    %c0_i32_1 = arith.constant 0 : i32
    return %c0_i32, %c0_i32_0 : i32, i32
  }
  func.func @transform_10(%arg0: i32) -> (i32, i32) {
    %c0_i32 = arith.constant 0 : i32
    %c0_i32_0 = arith.constant 0 : i32
    return %arg0, %c0_i32 : i32, i32
  }
  func.func @transform_11(%arg0: i32) -> (i32, i32) {
    %c0_i32 = arith.constant 0 : i32
    %c0_i32_0 = arith.constant 0 : i32
    return %arg0, %c0_i32 : i32, i32
  }
}

module attributes {stable_mosaic.version = 11 : i64} {
  func.func @vae_fwd_kernel(%arg0: i32, %arg1: memref<16x128xbf16, #tpu.memory_space<vmem>>, %arg2: memref<128x128xbf16, #tpu.memory_space<vmem>>, %arg3: memref<1x128xf32, #tpu.memory_space<vmem>>, %arg4: memref<128x256xbf16, #tpu.memory_space<vmem>>, %arg5: memref<1x256xf32, #tpu.memory_space<vmem>>, %arg6: memref<16x128xf32, #tpu.memory_space<vmem>>, %arg7: memref<128x128xbf16, #tpu.memory_space<vmem>>, %arg8: memref<1x128xf32, #tpu.memory_space<vmem>>, %arg9: memref<128x128xbf16, #tpu.memory_space<vmem>>, %arg10: memref<1x128xf32, #tpu.memory_space<vmem>>, %arg11: memref<16x128xf32, #tpu.memory_space<vmem>>, %arg12: memref<16x256xf32, #tpu.memory_space<vmem>>) attributes {dimension_semantics = [#tpu.dimension_semantics<parallel>], iteration_bounds = array<i64: 1>, scalar_prefetch = 0 : i64, scratch_operands = 0 : i64, tpu.core_type = #tpu.core_type<tc>, window_params = [{transform_indices = @transform_0, window_bounds = array<i64: 16, 128>}, {pipeline_mode = #tpu.pipeline_mode<synchronous>, transform_indices = @transform_1, window_bounds = array<i64: 128, 128>}, {pipeline_mode = #tpu.pipeline_mode<synchronous>, transform_indices = @transform_2, window_bounds = array<i64: 1, 128>}, {pipeline_mode = #tpu.pipeline_mode<synchronous>, transform_indices = @transform_3, window_bounds = array<i64: 128, 256>}, {pipeline_mode = #tpu.pipeline_mode<synchronous>, transform_indices = @transform_4, window_bounds = array<i64: 1, 256>}, {transform_indices = @transform_5, window_bounds = array<i64: 16, 128>}, {pipeline_mode = #tpu.pipeline_mode<synchronous>, transform_indices = @transform_6, window_bounds = array<i64: 128, 128>}, {pipeline_mode = #tpu.pipeline_mode<synchronous>, transform_indices = @transform_7, window_bounds = array<i64: 1, 128>}, {pipeline_mode = #tpu.pipeline_mode<synchronous>, transform_indices = @transform_8, window_bounds = array<i64: 128, 128>}, {pipeline_mode = #tpu.pipeline_mode<synchronous>, transform_indices = @transform_9, window_bounds = array<i64: 1, 128>}, {transform_indices = @transform_10, window_bounds = array<i64: 16, 128>}, {transform_indices = @transform_11, window_bounds = array<i64: 16, 256>}]} {
    %c0 = arith.constant 0 : index
    %c0_0 = arith.constant 0 : index
    %0 = vector.load %arg1[%c0, %c0_0] : memref<16x128xbf16, #tpu.memory_space<vmem>>, vector<16x128xbf16>
    %c0_1 = arith.constant 0 : index
    %c0_2 = arith.constant 0 : index
    %1 = vector.load %arg2[%c0_1, %c0_2] : memref<128x128xbf16, #tpu.memory_space<vmem>>, vector<128x128xbf16>
    %cst = arith.constant dense<0.000000e+00> : vector<16x128xf32>
    %2 = tpu.matmul %0, %1, %cst {dimension_numbers = #tpu.dot_dimension_numbers<[1], [0], [0], [1], [0, 0, 1, 1], [], []>} : vector<16x128xbf16>, vector<128x128xbf16>, vector<16x128xf32> -> vector<16x128xf32>
    %c0_3 = arith.constant 0 : index
    %c0_4 = arith.constant 0 : index
    %3 = vector.load %arg3[%c0_3, %c0_4] : memref<1x128xf32, #tpu.memory_space<vmem>>, vector<1x128xf32>
    %4 = vector.broadcast %3 : vector<1x128xf32> to vector<16x128xf32>
    %5 = arith.addf %2, %4 : vector<16x128xf32>
    %cst_5 = arith.constant 0.000000e+00 : f32
    %6 = vector.broadcast %cst_5 : f32 to vector<16x128xf32>
    %7 = arith.maximumf %5, %6 : vector<16x128xf32>
    %8 = arith.truncf %7 : vector<16x128xf32> to vector<16x128xbf16>
    %c0_6 = arith.constant 0 : index
    %c0_7 = arith.constant 0 : index
    %9 = vector.load %arg4[%c0_6, %c0_7] : memref<128x256xbf16, #tpu.memory_space<vmem>>, vector<128x256xbf16>
    %cst_8 = arith.constant dense<0.000000e+00> : vector<16x256xf32>
    %10 = tpu.matmul %8, %9, %cst_8 {dimension_numbers = #tpu.dot_dimension_numbers<[1], [0], [0], [1], [0, 0, 1, 1], [], []>} : vector<16x128xbf16>, vector<128x256xbf16>, vector<16x256xf32> -> vector<16x256xf32>
    %c0_9 = arith.constant 0 : index
    %c0_10 = arith.constant 0 : index
    %11 = vector.load %arg5[%c0_9, %c0_10] : memref<1x256xf32, #tpu.memory_space<vmem>>, vector<1x256xf32>
    %12 = vector.broadcast %11 : vector<1x256xf32> to vector<16x256xf32>
    %13 = arith.addf %10, %12 : vector<16x256xf32>
    %14 = vector.extract_strided_slice %13 {offsets = [0, 0], sizes = [16, 128], strides = [1, 1]} : vector<16x256xf32> to vector<16x128xf32>
    %15 = vector.extract_strided_slice %13 {offsets = [0, 128], sizes = [16, 128], strides = [1, 1]} : vector<16x256xf32> to vector<16x128xf32>
    %16 = math.exp %15 : vector<16x128xf32>
    %c0_11 = arith.constant 0 : index
    %c0_12 = arith.constant 0 : index
    %17 = vector.load %arg6[%c0_11, %c0_12] : memref<16x128xf32, #tpu.memory_space<vmem>>, vector<16x128xf32>
    %18 = arith.mulf %16, %17 : vector<16x128xf32>
    %19 = arith.addf %14, %18 : vector<16x128xf32>
    %20 = arith.truncf %19 : vector<16x128xf32> to vector<16x128xbf16>
    %c0_13 = arith.constant 0 : index
    %c0_14 = arith.constant 0 : index
    %21 = vector.load %arg7[%c0_13, %c0_14] : memref<128x128xbf16, #tpu.memory_space<vmem>>, vector<128x128xbf16>
    %cst_15 = arith.constant dense<0.000000e+00> : vector<16x128xf32>
    %22 = tpu.matmul %20, %21, %cst_15 {dimension_numbers = #tpu.dot_dimension_numbers<[1], [0], [0], [1], [0, 0, 1, 1], [], []>} : vector<16x128xbf16>, vector<128x128xbf16>, vector<16x128xf32> -> vector<16x128xf32>
    %c0_16 = arith.constant 0 : index
    %c0_17 = arith.constant 0 : index
    %23 = vector.load %arg8[%c0_16, %c0_17] : memref<1x128xf32, #tpu.memory_space<vmem>>, vector<1x128xf32>
    %24 = vector.broadcast %23 : vector<1x128xf32> to vector<16x128xf32>
    %25 = arith.addf %22, %24 : vector<16x128xf32>
    %cst_18 = arith.constant 0.000000e+00 : f32
    %26 = vector.broadcast %cst_18 : f32 to vector<16x128xf32>
    %27 = arith.maximumf %25, %26 : vector<16x128xf32>
    %28 = arith.truncf %27 : vector<16x128xf32> to vector<16x128xbf16>
    %c0_19 = arith.constant 0 : index
    %c0_20 = arith.constant 0 : index
    %29 = vector.load %arg9[%c0_19, %c0_20] : memref<128x128xbf16, #tpu.memory_space<vmem>>, vector<128x128xbf16>
    %cst_21 = arith.constant dense<0.000000e+00> : vector<16x128xf32>
    %30 = tpu.matmul %28, %29, %cst_21 {dimension_numbers = #tpu.dot_dimension_numbers<[1], [0], [0], [1], [0, 0, 1, 1], [], []>} : vector<16x128xbf16>, vector<128x128xbf16>, vector<16x128xf32> -> vector<16x128xf32>
    %c0_22 = arith.constant 0 : index
    %c0_23 = arith.constant 0 : index
    %31 = vector.load %arg10[%c0_22, %c0_23] : memref<1x128xf32, #tpu.memory_space<vmem>>, vector<1x128xf32>
    %32 = vector.broadcast %31 : vector<1x128xf32> to vector<16x128xf32>
    %33 = arith.addf %30, %32 : vector<16x128xf32>
    %cst_24 = arith.constant 5.000000e-01 : f32
    %34 = vector.broadcast %cst_24 : f32 to vector<16x128xf32>
    %35 = arith.mulf %34, %33 : vector<16x128xf32>
    %36 = math.tanh %35 : vector<16x128xf32>
    %cst_25 = arith.constant 1.000000e+00 : f32
    %37 = vector.broadcast %cst_25 : f32 to vector<16x128xf32>
    %38 = arith.addf %36, %37 : vector<16x128xf32>
    %cst_26 = arith.constant 5.000000e-01 : f32
    %39 = vector.broadcast %cst_26 : f32 to vector<16x128xf32>
    %40 = arith.mulf %39, %38 : vector<16x128xf32>
    %c0_27 = arith.constant 0 : index
    %c0_28 = arith.constant 0 : index
    %41 = vector.load %arg11[%c0_27, %c0_28] : memref<16x128xf32, #tpu.memory_space<vmem>>, vector<16x128xf32>
    tpu.vector_store %arg11[%c0_27, %c0_28], %40 {strides = array<i32>} : memref<16x128xf32, #tpu.memory_space<vmem>>, vector<16x128xf32>,
    %c0_29 = arith.constant 0 : index
    %c0_30 = arith.constant 0 : index
    %42 = vector.load %arg12[%c0_29, %c0_30] : memref<16x256xf32, #tpu.memory_space<vmem>>, vector<16x128xf32>
    tpu.vector_store %arg12[%c0_29, %c0_30], %14 {strides = array<i32>} : memref<16x256xf32, #tpu.memory_space<vmem>>, vector<16x128xf32>,
    %c0_31 = arith.constant 0 : index
    %c128 = arith.constant 128 : index
    %43 = vector.load %arg12[%c0_31, %c128] : memref<16x256xf32, #tpu.memory_space<vmem>>, vector<16x128xf32>
    tpu.vector_store %arg12[%c0_31, %c128], %16 {strides = array<i32>} : memref<16x256xf32, #tpu.memory_space<vmem>>, vector<16x128xf32>,
    return
  }
  func.func @transform_0(%arg0: i32) -> (i32, i32) {
    %c0_i32 = arith.constant 0 : i32
    %c0_i32_0 = arith.constant 0 : i32
    return %arg0, %c0_i32 : i32, i32
  }
  func.func @transform_1(%arg0: i32) -> (i32, i32) {
    %c0_i32 = arith.constant 0 : i32
    %c0_i32_0 = arith.constant 0 : i32
    %c0_i32_1 = arith.constant 0 : i32
    return %c0_i32, %c0_i32_0 : i32, i32
  }
  func.func @transform_2(%arg0: i32) -> (i32, i32) {
    %c0_i32 = arith.constant 0 : i32
    %c0_i32_0 = arith.constant 0 : i32
    %c0_i32_1 = arith.constant 0 : i32
    return %c0_i32, %c0_i32_0 : i32, i32
  }
  func.func @transform_3(%arg0: i32) -> (i32, i32) {
    %c0_i32 = arith.constant 0 : i32
    %c0_i32_0 = arith.constant 0 : i32
    %c0_i32_1 = arith.constant 0 : i32
    return %c0_i32, %c0_i32_0 : i32, i32
  }
  func.func @transform_4(%arg0: i32) -> (i32, i32) {
    %c0_i32 = arith.constant 0 : i32
    %c0_i32_0 = arith.constant 0 : i32
    %c0_i32_1 = arith.constant 0 : i32
    return %c0_i32, %c0_i32_0 : i32, i32
  }
  func.func @transform_5(%arg0: i32) -> (i32, i32) {
    %c0_i32 = arith.constant 0 : i32
    %c0_i32_0 = arith.constant 0 : i32
    return %arg0, %c0_i32 : i32, i32
  }
  func.func @transform_6(%arg0: i32) -> (i32, i32) {
    %c0_i32 = arith.constant 0 : i32
    %c0_i32_0 = arith.constant 0 : i32
    %c0_i32_1 = arith.constant 0 : i32
    return %c0_i32, %c0_i32_0 : i32, i32
  }
  func.func @transform_7(%arg0: i32) -> (i32, i32) {
    %c0_i32 = arith.constant 0 : i32
    %c0_i32_0 = arith.constant 0 : i32
    %c0_i32_1 = arith.constant 0 : i32
    return %c0_i32, %c0_i32_0 : i32, i32
  }
  func.func @transform_8(%arg0: i32) -> (i32, i32) {
    %c0_i32 = arith.constant 0 : i32
    %c0_i32_0 = arith.constant 0 : i32
    %c0_i32_1 = arith.constant 0 : i32
    return %c0_i32, %c0_i32_0 : i32, i32
  }
  func.func @transform_9(%arg0: i32) -> (i32, i32) {
    %c0_i32 = arith.constant 0 : i32
    %c0_i32_0 = arith.constant 0 : i32
    %c0_i32_1 = arith.constant 0 : i32
    return %c0_i32, %c0_i32_0 : i32, i32
  }
  func.func @transform_10(%arg0: i32) -> (i32, i32) {
    %c0_i32 = arith.constant 0 : i32
    %c0_i32_0 = arith.constant 0 : i32
    return %arg0, %c0_i32 : i32, i32
  }
  func.func @transform_11(%arg0: i32) -> (i32, i32) {
    %c0_i32 = arith.constant 0 : i32
    %c0_i32_0 = arith.constant 0 : i32
    return %arg0, %c0_i32 : i32, i32
  }
}

</mosaic_0001>

<llo_original>
// kernel: tpu_custom_call.1
$region0: #{tpu_custom_call.1}
  #allocation0 [shape = 'u32[]', space=smem, size = 0x4, offset = 0x4, fixed_abs, tag = 'smem constant byte address 0x4 - core index']
  #allocation1 [shape = 'u32[72,128]{1,0:T(1,128)}', space=vmem, size = 0x9000, scoped, tag = 'internal scratch']
  %s0 = inlined_call_operand.hbm [shape: bf16[16,128], index: 0, kind: input, shape index: {}]
  %s1 = inlined_call_operand.hbm [shape: bf16[128,128], index: 1, kind: input, shape index: {}]
  %s2 = inlined_call_operand.vmem [shape: f32[1,128], index: 2, kind: input, shape index: {}]
  %s3 = inlined_call_operand.hbm [shape: bf16[128,256], index: 3, kind: input, shape index: {}]
  %s4 = inlined_call_operand.vmem [shape: f32[1,256], index: 4, kind: input, shape index: {}]
  %s5 = inlined_call_operand.hbm [shape: f32[16,128], index: 5, kind: input, shape index: {}]
  %s6 = inlined_call_operand.hbm [shape: bf16[128,128], index: 6, kind: input, shape index: {}]
  %s7 = inlined_call_operand.vmem [shape: f32[1,128], index: 7, kind: input, shape index: {}]
  %s8 = inlined_call_operand.hbm [shape: bf16[128,128], index: 8, kind: input, shape index: {}]
  %s9 = inlined_call_operand.vmem [shape: f32[1,128], index: 9, kind: input, shape index: {}]
  %s10 = inlined_call_operand.hbm [shape: f32[16,128], index: 10, kind: output, shape index: {0}]
  %s11 = inlined_call_operand.hbm [shape: f32[16,256], index: 11, kind: output, shape index: {1}]
  %12 = xla_tuple %s10, %s11
  %s13 = sld [smem:[#allocation0]]
  $region82: #{tpu_custom_call.1} parent=0
    _
  %s15 = ssub.s32 1, %s13
  %s16 = scalar_select 0, %s15, %s13
  $region1: #{tpu_custom_call.1} parent=0
    #allocation2 [shape = 'u8[4096]{0}', space=vmem, size = 0x1000, scoped, tag = 'input window, operand 0, single buffered']
    #allocation3 [shape = 's32[1]{0}', space=sflag, size = 0x4, scoped, tag = 'scoped memory for tpu_custom_call.1']
    #allocation4 [shape = 's32[1]{0}', space=sflag, size = 0x4, scoped, tag = 'scoped memory for tpu_custom_call.1']
    #allocation5 [shape = 'u8[32768]{0}', space=vmem, size = 0x8000, scoped, tag = 'input window, operand 1, single buffered']
    #allocation6 [shape = 's32[1]{0}', space=sflag, size = 0x4, scoped, tag = 'scoped memory for tpu_custom_call.1']
    #allocation7 [shape = 'u8[65536]{0}', space=vmem, size = 0x10000, scoped, tag = 'input window, operand 3, single buffered']
    #allocation8 [shape = 'u8[8192]{0}', space=vmem, size = 0x2000, scoped, tag = 'input window, operand 5, single buffered']
    #allocation9 [shape = 's32[1]{0}', space=sflag, size = 0x4, scoped, tag = 'scoped memory for tpu_custom_call.1']
    #allocation10 [shape = 'u8[32768]{0}', space=vmem, size = 0x8000, scoped, tag = 'input window, operand 6, single buffered']
    #allocation11 [shape = 'u8[32768]{0}', space=vmem, size = 0x8000, scoped, tag = 'input window, operand 8, single buffered']
    #allocation12 [shape = 's32[1]{0}', space=sflag, size = 0x4, scoped, tag = 'scoped memory for tpu_custom_call.1']
    #allocation13 [shape = 'u8[8192]{0}', space=vmem, size = 0x2000, scoped, tag = 'output window, operand 0, single buffered']
    #allocation14 [shape = 'u8[16384]{0}', space=vmem, size = 0x4000, scoped, tag = 'output window, operand 1, single buffered']
    #allocation15 [shape = 's32[1]{0}', space=sflag, size = 0x4, scoped, tag = 'scoped memory for tpu_custom_call.1']
    %17 = vsyncpa [#allocation3], 0
    %18 = vsyncpa [#allocation6], 0
    %19 = vsyncpa [#allocation9], 0
    %20 = vsyncpa [#allocation12], 0
    %21 = vsyncpa [#allocation4], 0
    %22 = vsyncpa [#allocation15], 0
    // Predicated region
    $region2: #{tpu_custom_call.1} parent=1 // pred_check
      _
    $region3: #{tpu_custom_call.1} parent=1 // pred_check_branch
      %24 = sbr.rel (0) target = $region5
    $region4: #{tpu_custom_call.1} parent=1 // pred_region
      %26 = vsyncadd [#allocation3], 0
      %s27 = sshll.u32 %s0, 4
      %s28 = int_to_ptr.hbm [resolvable:$true] %s27
      %s29 = sshll.u32 [#allocation2], 4
      %s30 = int_to_ptr.vmem [resolvable:$true] %s29
      %35 = dma.hbm_to_vmem [thread:$0]  %s28, 128, %s30, [#allocation3], 64, 64, 4
    $region5: #{tpu_custom_call.1} parent=1 // pred_fallthru
      _
    // Predicated region
    $region6: #{tpu_custom_call.1} parent=1 // pred_check
      _
    $region7: #{tpu_custom_call.1} parent=1 // pred_check_branch
      %37 = sbr.rel (0) target = $region9
    $region8: #{tpu_custom_call.1} parent=1 // pred_region
      %39 = vsyncadd [#allocation6], 0
      %s40 = sshll.u32 %s1, 4
      %s41 = int_to_ptr.hbm [resolvable:$true] %s40
      %s42 = sshll.u32 [#allocation5], 4
      %s43 = int_to_ptr.vmem [resolvable:$true] %s42
      %48 = dma.hbm_to_vmem [thread:$0]  %s41, 1024, %s43, [#allocation6], 64, 64, 4
    $region9: #{tpu_custom_call.1} parent=1 // pred_fallthru
      _
    // Predicated region
    $region10: #{tpu_custom_call.1} parent=1 // pred_check
      _
    $region11: #{tpu_custom_call.1} parent=1 // pred_check_branch
      %50 = sbr.rel (0) target = $region13
    $region12: #{tpu_custom_call.1} parent=1 // pred_region
      _
    $region13: #{tpu_custom_call.1} parent=1 // pred_fallthru
      _
    // Predicated region
    $region14: #{tpu_custom_call.1} parent=1 // pred_check
      _
    $region15: #{tpu_custom_call.1} parent=1 // pred_check_branch
      %52 = sbr.rel (0) target = $region17
    $region16: #{tpu_custom_call.1} parent=1 // pred_region
      %54 = vsyncadd [#allocation6], 0
      %s55 = sshll.u32 %s3, 4
      %s56 = int_to_ptr.hbm [resolvable:$true] %s55
      %s57 = sshll.u32 [#allocation7], 4
      %s58 = int_to_ptr.vmem [resolvable:$true] %s57
      %63 = dma.hbm_to_vmem [thread:$0]  %s56, 2048, %s58, [#allocation6], 128, 128, 8
    $region17: #{tpu_custom_call.1} parent=1 // pred_fallthru
      _
    // Predicated region
    $region18: #{tpu_custom_call.1} parent=1 // pred_check
      _
    $region19: #{tpu_custom_call.1} parent=1 // pred_check_branch
      %65 = sbr.rel (0) target = $region21
    $region20: #{tpu_custom_call.1} parent=1 // pred_region
      _
    $region21: #{tpu_custom_call.1} parent=1 // pred_fallthru
      _
    // Predicated region
    $region22: #{tpu_custom_call.1} parent=1 // pred_check
      _
    $region23: #{tpu_custom_call.1} parent=1 // pred_check_branch
      %67 = sbr.rel (0) target = $region25
    $region24: #{tpu_custom_call.1} parent=1 // pred_region
      %69 = vsyncadd [#allocation9], 0
      %s70 = sshll.u32 %s5, 4
      %s71 = int_to_ptr.hbm [resolvable:$true] %s70
      %s72 = sshll.u32 [#allocation8], 4
      %s73 = int_to_ptr.vmem [resolvable:$true] %s72
      %78 = dma.hbm_to_vmem [thread:$0]  %s71, 256, %s73, [#allocation9], 128, 128, 8
    $region25: #{tpu_custom_call.1} parent=1 // pred_fallthru
      _
    // Predicated region
    $region26: #{tpu_custom_call.1} parent=1 // pred_check
      _
    $region27: #{tpu_custom_call.1} parent=1 // pred_check_branch
      %80 = sbr.rel (0) target = $region29
    $region28: #{tpu_custom_call.1} parent=1 // pred_region
      %82 = vsyncadd [#allocation9], 0
      %s83 = sshll.u32 %s6, 4
      %s84 = int_to_ptr.hbm [resolvable:$true] %s83
      %s85 = sshll.u32 [#allocation10], 4
      %s86 = int_to_ptr.vmem [resolvable:$true] %s85
      %91 = dma.hbm_to_vmem [thread:$0]  %s84, 1024, %s86, [#allocation9], 64, 64, 4
    $region29: #{tpu_custom_call.1} parent=1 // pred_fallthru
      _
    // Predicated region
    $region30: #{tpu_custom_call.1} parent=1 // pred_check
      _
    $region31: #{tpu_custom_call.1} parent=1 // pred_check_branch
      %93 = sbr.rel (0) target = $region33
    $region32: #{tpu_custom_call.1} parent=1 // pred_region
      _
    $region33: #{tpu_custom_call.1} parent=1 // pred_fallthru
      _
    // Predicated region
    $region34: #{tpu_custom_call.1} parent=1 // pred_check
      _
    $region35: #{tpu_custom_call.1} parent=1 // pred_check_branch
      %95 = sbr.rel (0) target = $region37
    $region36: #{tpu_custom_call.1} parent=1 // pred_region
      %97 = vsyncadd [#allocation12], 0
      %s98 = sshll.u32 %s8, 4
      %s99 = int_to_ptr.hbm [resolvable:$true] %s98
      %s100 = sshll.u32 [#allocation11], 4
      %s101 = int_to_ptr.vmem [resolvable:$true] %s100
      %106 = dma.hbm_to_vmem [thread:$0]  %s99, 1024, %s101, [#allocation12], 64, 64, 4
    $region37: #{tpu_custom_call.1} parent=1 // pred_fallthru
      _
    // Predicated region
    $region38: #{tpu_custom_call.1} parent=1 // pred_check
      _
    $region39: #{tpu_custom_call.1} parent=1 // pred_check_branch
      %108 = sbr.rel (0) target = $region41
    $region40: #{tpu_custom_call.1} parent=1 // pred_region
      _
    $region41: #{tpu_custom_call.1} parent=1 // pred_fallthru
      _
    // Predicated region
    $region42: #{tpu_custom_call.1} parent=1 // pred_check
      _
    $region43: #{tpu_custom_call.1} parent=1 // pred_check_branch
      %110 = sbr.rel (0) target = $region45
    $region44: #{tpu_custom_call.1} parent=1 // pred_region
      %112 = dma.done [#allocation3], 128
    $region45: #{tpu_custom_call.1} parent=1 // pred_fallthru
      _
    // Predicated region
    $region46: #{tpu_custom_call.1} parent=1 // pred_check
      _
    $region47: #{tpu_custom_call.1} parent=1 // pred_check_branch
      %114 = sbr.rel (0) target = $region49
    $region48: #{tpu_custom_call.1} parent=1 // pred_region
      %116 = dma.done [#allocation6], 1024
    $region49: #{tpu_custom_call.1} parent=1 // pred_fallthru
      _
    // Predicated region
    $region50: #{tpu_custom_call.1} parent=1 // pred_check
      _
    $region51: #{tpu_custom_call.1} parent=1 // pred_check_branch
      %118 = sbr.rel (0) target = $region53
    $region52: #{tpu_custom_call.1} parent=1 // pred_region
      %120 = dma.done [#allocation6], 2048
    $region53: #{tpu_custom_call.1} parent=1 // pred_fallthru
      _
    // Predicated region
    $region54: #{tpu_custom_call.1} parent=1 // pred_check
      _
    $region55: #{tpu_custom_call.1} parent=1 // pred_check_branch
      %122 = sbr.rel (0) target = $region57
    $region56: #{tpu_custom_call.1} parent=1 // pred_region
      %124 = dma.done [#allocation9], 256
    $region57: #{tpu_custom_call.1} parent=1 // pred_fallthru
      _
    // Predicated region
    $region58: #{tpu_custom_call.1} parent=1 // pred_check
      _
    $region59: #{tpu_custom_call.1} parent=1 // pred_check_branch
      %126 = sbr.rel (0) target = $region61
    $region60: #{tpu_custom_call.1} parent=1 // pred_region
      %128 = dma.done [#allocation9], 1024
    $region61: #{tpu_custom_call.1} parent=1 // pred_fallthru
      _
    // Predicated region
    $region62: #{tpu_custom_call.1} parent=1 // pred_check
      _
    $region63: #{tpu_custom_call.1} parent=1 // pred_check_branch
      %130 = sbr.rel (0) target = $region65
    $region64: #{tpu_custom_call.1} parent=1 // pred_region
      %132 = dma.done [#allocation12], 1024
    $region65: #{tpu_custom_call.1} parent=1 // pred_fallthru
      _
    %v133 = vld [vmem:[#allocation2] sm:$0xf]
    %v134 = vld [vmem:[#allocation2 + $0x4] sm:$0xf]
    %v135 = vld [vmem:[#allocation5] sm:$0xf]
    %v136 = vld [vmem:[#allocation5 + $0x4] sm:$0xf]
    %v137 = vld [vmem:[#allocation5 + $0x8] sm:$0xf]
    %v138 = vld [vmem:[#allocation5 + $0xc] sm:$0xf]
    %v139 = vld [vmem:[#allocation5 + $0x10] sm:$0xf]
    %v140 = vld [vmem:[#allocation5 + $0x14] sm:$0xf]
    %v141 = vld [vmem:[#allocation5 + $0x18] sm:$0xf]
    %v142 = vld [vmem:[#allocation5 + $0x1c] sm:$0xf]
    %v143 = vld [vmem:[#allocation5 + $0x20] sm:$0xf]
    %v144 = vld [vmem:[#allocation5 + $0x24] sm:$0xf]
    %v145 = vld [vmem:[#allocation5 + $0x28] sm:$0xf]
    %v146 = vld [vmem:[#allocation5 + $0x2c] sm:$0xf]
    %v147 = vld [vmem:[#allocation5 + $0x30] sm:$0xf]
    %v148 = vld [vmem:[#allocation5 + $0x34] sm:$0xf]
    %v149 = vld [vmem:[#allocation5 + $0x38] sm:$0xf]
    %v150 = vld [vmem:[#allocation5 + $0x3c] sm:$0xf]
    %v151 = vld [vmem:[%s2] sm:$0x1]
    %v153 = vperm.slane %v151, 0
    %v157 = vunpack.c.l.b16 %v133
    %v158 = vunpack.c.l.b16 %v134
    %v159 = vpack.c.b16 %v158, %v157
    %v177 = vunpack.c.l.b16 %v135
    %v178 = vunpack.c.l.b16 %v136
    %v179 = vunpack.c.l.b16 %v137
    %v180 = vunpack.c.l.b16 %v138
    %v181 = vunpack.c.l.b16 %v139
    %v182 = vunpack.c.l.b16 %v140
    %v183 = vunpack.c.l.b16 %v141
    %v184 = vunpack.c.l.b16 %v142
    %v185 = vunpack.c.l.b16 %v143
    %v186 = vunpack.c.l.b16 %v144
    %v187 = vunpack.c.l.b16 %v145
    %v188 = vunpack.c.l.b16 %v146
    %v189 = vunpack.c.l.b16 %v147
    %v190 = vunpack.c.l.b16 %v148
    %v191 = vunpack.c.l.b16 %v149
    %v192 = vunpack.c.l.b16 %v150
    %v193 = vpack.c.b16 %v178, %v177
    %v194 = vpack.c.b16 %v180, %v179
    %v195 = vpack.c.b16 %v182, %v181
    %v196 = vpack.c.b16 %v184, %v183
    %v197 = vpack.c.b16 %v186, %v185
    %v198 = vpack.c.b16 %v188, %v187
    %v199 = vpack.c.b16 %v190, %v189
    %v200 = vpack.c.b16 %v192, %v191
    %209 = vmatpush.bf16.msra.mxu0 %v200
    %210 = vmatpush.bf16.msra.mxu0 %v199
    %211 = vmatpush.bf16.msra.mxu0 %v198
    %212 = vmatpush.bf16.msra.mxu0 %v197
    %213 = vmatpush.bf16.msra.mxu0 %v196
    %214 = vmatpush.bf16.msra.mxu0 %v195
    %215 = vmatpush.bf16.msra.mxu0 %v194
    %216 = vmatpush.bf16.msra.mxu0 %v193
    %217 = vmatmul.bf16.gmra.mxu0 %v159
    %v218 = vpop.f32.mrf.mxu0
    %v219 = vadd.f32 %v153, %v218
    %v220 = vpop.f32.mrf.mxu0
    %v221 = vadd.f32 %v153, %v220
    %222 = vdwg.mxu0
    %v223 = vmax.f32 %v219, 0.0
    %v224 = vmax.f32 %v221, 0.0
    %v225 = vpack.c.bf16 %v224, %v223
    %v226 = vld [vmem:[#allocation7] sm:$0xff]
    %v227 = vld [vmem:[#allocation7 + $0x8] sm:$0xff]
    %v228 = vld [vmem:[#allocation7 + $0x10] sm:$0xff]
    %v229 = vld [vmem:[#allocation7 + $0x18] sm:$0xff]
    %v230 = vld [vmem:[#allocation7 + $0x20] sm:$0xff]
    %v231 = vld [vmem:[#allocation7 + $0x28] sm:$0xff]
    %v232 = vld [vmem:[#allocation7 + $0x30] sm:$0xff]
    %v233 = vld [vmem:[#allocation7 + $0x38] sm:$0xff]
    %v234 = vld [vmem:[#allocation7 + $0x40] sm:$0xff]
    %v235 = vld [vmem:[#allocation7 + $0x48] sm:$0xff]
    %v236 = vld [vmem:[#allocation7 + $0x50] sm:$0xff]
    %v237 = vld [vmem:[#allocation7 + $0x58] sm:$0xff]
    %v238 = vld [vmem:[#allocation7 + $0x60] sm:$0xff]
    %v239 = vld [vmem:[#allocation7 + $0x68] sm:$0xff]
    %v240 = vld [vmem:[#allocation7 + $0x70] sm:$0xff]
    %v241 = vld [vmem:[#allocation7 + $0x78] sm:$0xff]
    %v242 = vld [vmem:[%s4] sm:$0x3]
    %v244 = vperm.slane %v242, 0
    %v245 = vperm.slane %v242, 1
    %v264 = vunpack.c.l.b16 %v226
    %v265 = vunpack.c.h.b16 %v226
    %v266 = vunpack.c.l.b16 %v227
    %v267 = vunpack.c.h.b16 %v227
    %v268 = vunpack.c.l.b16 %v228
    %v269 = vunpack.c.h.b16 %v228
    %v270 = vunpack.c.l.b16 %v229
    %v271 = vunpack.c.h.b16 %v229
    %v272 = vunpack.c.l.b16 %v230
    %v273 = vunpack.c.h.b16 %v230
    %v274 = vunpack.c.l.b16 %v231
    %v275 = vunpack.c.h.b16 %v231
    %v276 = vunpack.c.l.b16 %v232
    %v277 = vunpack.c.h.b16 %v232
    %v278 = vunpack.c.l.b16 %v233
    %v279 = vunpack.c.h.b16 %v233
    %v280 = vunpack.c.l.b16 %v234
    %v281 = vunpack.c.h.b16 %v234
    %v282 = vunpack.c.l.b16 %v235
    %v283 = vunpack.c.h.b16 %v235
    %v284 = vunpack.c.l.b16 %v236
    %v285 = vunpack.c.h.b16 %v236
    %v286 = vunpack.c.l.b16 %v237
    %v287 = vunpack.c.h.b16 %v237
    %v288 = vunpack.c.l.b16 %v238
    %v289 = vunpack.c.h.b16 %v238
    %v290 = vunpack.c.l.b16 %v239
    %v291 = vunpack.c.h.b16 %v239
    %v292 = vunpack.c.l.b16 %v240
    %v293 = vunpack.c.h.b16 %v240
    %v294 = vunpack.c.l.b16 %v241
    %v295 = vunpack.c.h.b16 %v241
    %v296 = vpack.c.b16 %v266, %v264
    %v297 = vpack.c.b16 %v267, %v265
    %v298 = vpack.c.b16 %v270, %v268
    %v299 = vpack.c.b16 %v271, %v269
    %v300 = vpack.c.b16 %v274, %v272
    %v301 = vpack.c.b16 %v275, %v273
    %v302 = vpack.c.b16 %v278, %v276
    %v303 = vpack.c.b16 %v279, %v277
    %v304 = vpack.c.b16 %v282, %v280
    %v305 = vpack.c.b16 %v283, %v281
    %v306 = vpack.c.b16 %v286, %v284
    %v307 = vpack.c.b16 %v287, %v285
    %v308 = vpack.c.b16 %v290, %v288
    %v309 = vpack.c.b16 %v291, %v289
    %v310 = vpack.c.b16 %v294, %v292
    %v311 = vpack.c.b16 %v295, %v293
    %328 = vmatpush.bf16.msra.mxu0 %v310
    %329 = vmatpush.bf16.msra.mxu0 %v308
    %330 = vmatpush.bf16.msra.mxu0 %v306
    %331 = vmatpush.bf16.msra.mxu0 %v304
    %332 = vmatpush.bf16.msra.mxu0 %v302
    %333 = vmatpush.bf16.msra.mxu0 %v300
    %334 = vmatpush.bf16.msra.mxu0 %v298
    %335 = vmatpush.bf16.msra.mxu0 %v296
    %336 = vmatmul.bf16.gmra.mxu0 %v225
    %v337 = vpop.f32.mrf.mxu0
    %v338 = vadd.f32 %v244, %v337
    %v339 = vpop.f32.mrf.mxu0
    %v340 = vadd.f32 %v244, %v339
    %341 = vdwg.mxu0
    %342 = vmatpush.bf16.msra.mxu0 %v311
    %343 = vmatpush.bf16.msra.mxu0 %v309
    %344 = vmatpush.bf16.msra.mxu0 %v307
    %345 = vmatpush.bf16.msra.mxu0 %v305
    %346 = vmatpush.bf16.msra.mxu0 %v303
    %347 = vmatpush.bf16.msra.mxu0 %v301
    %348 = vmatpush.bf16.msra.mxu0 %v299
    %349 = vmatpush.bf16.msra.mxu0 %v297
    %350 = vmatmul.bf16.gmra.mxu0 %v225
    %v351 = vpop.f32.mrf.mxu0
    %v352 = vadd.f32 %v245, %v351
    %v353 = vpop.f32.mrf.mxu0
    %v354 = vadd.f32 %v245, %v353
    %355 = vdwg.mxu0
    %v356 = vmul.f32 %v352, 1.442695
    %v357 = vpow.pop %v356
    %v358 = vmul.f32 %v354, 1.442695
    %v359 = vpow.pop %v358
    %v360 = vld [vmem:[#allocation8] sm:$0xff]
    %v361 = vld [vmem:[#allocation8 + $0x8] sm:$0xff]
    %v362 = vmul.f32 %v357, %v360
    %v363 = vmul.f32 %v359, %v361
    %v364 = vadd.f32 %v338, %v362
    %v365 = vadd.f32 %v340, %v363
    %v366 = vpack.c.bf16 %v365, %v364
    %v367 = vld [vmem:[#allocation10] sm:$0xf]
    %v368 = vld [vmem:[#allocation10 + $0x4] sm:$0xf]
    %v369 = vld [vmem:[#allocation10 + $0x8] sm:$0xf]
    %v370 = vld [vmem:[#allocation10 + $0xc] sm:$0xf]
    %v371 = vld [vmem:[#allocation10 + $0x10] sm:$0xf]
    %v372 = vld [vmem:[#allocation10 + $0x14] sm:$0xf]
    %v373 = vld [vmem:[#allocation10 + $0x18] sm:$0xf]
    %v374 = vld [vmem:[#allocation10 + $0x1c] sm:$0xf]
    %v375 = vld [vmem:[#allocation10 + $0x20] sm:$0xf]
    %v376 = vld [vmem:[#allocation10 + $0x24] sm:$0xf]
    %v377 = vld [vmem:[#allocation10 + $0x28] sm:$0xf]
    %v378 = vld [vmem:[#allocation10 + $0x2c] sm:$0xf]
    %v379 = vld [vmem:[#allocation10 + $0x30] sm:$0xf]
    %v380 = vld [vmem:[#allocation10 + $0x34] sm:$0xf]
    %v381 = vld [vmem:[#allocation10 + $0x38] sm:$0xf]
    %v382 = vld [vmem:[#allocation10 + $0x3c] sm:$0xf]
    %v383 = vld [vmem:[%s7] sm:$0x1]
    %v385 = vperm.slane %v383, 0
    %v403 = vunpack.c.l.b16 %v367
    %v404 = vunpack.c.l.b16 %v368
    %v405 = vunpack.c.l.b16 %v369
    %v406 = vunpack.c.l.b16 %v370
    %v407 = vunpack.c.l.b16 %v371
    %v408 = vunpack.c.l.b16 %v372
    %v409 = vunpack.c.l.b16 %v373
    %v410 = vunpack.c.l.b16 %v374
    %v411 = vunpack.c.l.b16 %v375
    %v412 = vunpack.c.l.b16 %v376
    %v413 = vunpack.c.l.b16 %v377
    %v414 = vunpack.c.l.b16 %v378
    %v415 = vunpack.c.l.b16 %v379
    %v416 = vunpack.c.l.b16 %v380
    %v417 = vunpack.c.l.b16 %v381
    %v418 = vunpack.c.l.b16 %v382
    %v419 = vpack.c.b16 %v404, %v403
    %v420 = vpack.c.b16 %v406, %v405
    %v421 = vpack.c.b16 %v408, %v407
    %v422 = vpack.c.b16 %v410, %v409
    %v423 = vpack.c.b16 %v412, %v411
    %v424 = vpack.c.b16 %v414, %v413
    %v425 = vpack.c.b16 %v416, %v415
    %v426 = vpack.c.b16 %v418, %v417
    %435 = vmatpush.bf16.msra.mxu0 %v426
    %436 = vmatpush.bf16.msra.mxu0 %v425
    %437 = vmatpush.bf16.msra.mxu0 %v424
    %438 = vmatpush.bf16.msra.mxu0 %v423
    %439 = vmatpush.bf16.msra.mxu0 %v422
    %440 = vmatpush.bf16.msra.mxu0 %v421
    %441 = vmatpush.bf16.msra.mxu0 %v420
    %442 = vmatpush.bf16.msra.mxu0 %v419
    %443 = vmatmul.bf16.gmra.mxu0 %v366
    %v444 = vpop.f32.mrf.mxu0
    %v445 = vadd.f32 %v385, %v444
    %v446 = vpop.f32.mrf.mxu0
    %v447 = vadd.f32 %v385, %v446
    %448 = vdwg.mxu0
    %v449 = vmax.f32 %v445, 0.0
    %v450 = vmax.f32 %v447, 0.0
    %v451 = vpack.c.bf16 %v450, %v449
    %v452 = vld [vmem:[#allocation11] sm:$0xf]
    %v453 = vld [vmem:[#allocation11 + $0x4] sm:$0xf]
    %v454 = vld [vmem:[#allocation11 + $0x8] sm:$0xf]
    %v455 = vld [vmem:[#allocation11 + $0xc] sm:$0xf]
    %v456 = vld [vmem:[#allocation11 + $0x10] sm:$0xf]
    %v457 = vld [vmem:[#allocation11 + $0x14] sm:$0xf]
    %v458 = vld [vmem:[#allocation11 + $0x18] sm:$0xf]
    %v459 = vld [vmem:[#allocation11 + $0x1c] sm:$0xf]
    %v460 = vld [vmem:[#allocation11 + $0x20] sm:$0xf]
    %v461 = vld [vmem:[#allocation11 + $0x24] sm:$0xf]
    %v462 = vld [vmem:[#allocation11 + $0x28] sm:$0xf]
    %v463 = vld [vmem:[#allocation11 + $0x2c] sm:$0xf]
    %v464 = vld [vmem:[#allocation11 + $0x30] sm:$0xf]
    %v465 = vld [vmem:[#allocation11 + $0x34] sm:$0xf]
    %v466 = vld [vmem:[#allocation11 + $0x38] sm:$0xf]
    %v467 = vld [vmem:[#allocation11 + $0x3c] sm:$0xf]
    %v468 = vld [vmem:[%s9] sm:$0x1]
    %v470 = vperm.slane %v468, 0
    %v488 = vunpack.c.l.b16 %v452
    %v489 = vunpack.c.l.b16 %v453
    %v490 = vunpack.c.l.b16 %v454
    %v491 = vunpack.c.l.b16 %v455
    %v492 = vunpack.c.l.b16 %v456
    %v493 = vunpack.c.l.b16 %v457
    %v494 = vunpack.c.l.b16 %v458
    %v495 = vunpack.c.l.b16 %v459
    %v496 = vunpack.c.l.b16 %v460
    %v497 = vunpack.c.l.b16 %v461
    %v498 = vunpack.c.l.b16 %v462
    %v499 = vunpack.c.l.b16 %v463
    %v500 = vunpack.c.l.b16 %v464
    %v501 = vunpack.c.l.b16 %v465
    %v502 = vunpack.c.l.b16 %v466
    %v503 = vunpack.c.l.b16 %v467
    %v504 = vpack.c.b16 %v489, %v488
    %v505 = vpack.c.b16 %v491, %v490
    %v506 = vpack.c.b16 %v493, %v492
    %v507 = vpack.c.b16 %v495, %v494
    %v508 = vpack.c.b16 %v497, %v496
    %v509 = vpack.c.b16 %v499, %v498
    %v510 = vpack.c.b16 %v501, %v500
    %v511 = vpack.c.b16 %v503, %v502
    %520 = vmatpush.bf16.msra.mxu0 %v511
    %521 = vmatpush.bf16.msra.mxu0 %v510
    %522 = vmatpush.bf16.msra.mxu0 %v509
    %523 = vmatpush.bf16.msra.mxu0 %v508
    %524 = vmatpush.bf16.msra.mxu0 %v507
    %525 = vmatpush.bf16.msra.mxu0 %v506
    %526 = vmatpush.bf16.msra.mxu0 %v505
    %527 = vmatpush.bf16.msra.mxu0 %v504
    %528 = vmatmul.bf16.gmra.mxu0 %v451
    %v529 = vpop.f32.mrf.mxu0
    %v530 = vadd.f32 %v470, %v529
    %v531 = vpop.f32.mrf.mxu0
    %v532 = vadd.f32 %v470, %v531
    %533 = vdwg.mxu0
    %v534 = vmul.f32 %v530, 0.5
    %v535 = vmul.f32 %v532, 0.5
    %v536 = vtanh.pop %v534
    %v537 = vtanh.pop %v535
    %v538 = vadd.f32 %v536, 1.0
    %v539 = vadd.f32 %v537, 1.0
    %v540 = vmul.f32 %v538, 0.5
    %v541 = vmul.f32 %v539, 0.5
    %542 = vst [vmem:[#allocation13] sm:$0xff] %v540
    %543 = vst [vmem:[#allocation13 + $0x8] sm:$0xff] %v541
    %544 = vst [vmem:[#allocation14] sm:$0xff] %v338
    %545 = vst [vmem:[#allocation14 + $0x10] sm:$0xff] %v340
    %546 = vst [vmem:[#allocation14 + $0x8] sm:$0xff] %v357
    %547 = vst [vmem:[#allocation14 + $0x18] sm:$0xff] %v359
    // Predicated region
    $region66: #{tpu_custom_call.1} parent=1 // pred_check
      _
    $region67: #{tpu_custom_call.1} parent=1 // pred_check_branch
      %549 = sbr.rel (0) target = $region69
    $region68: #{tpu_custom_call.1} parent=1 // pred_region
      %551 = vsyncadd [#allocation4], 0
      %s552 = sshll.u32 [#allocation13], 4
      %s553 = int_to_ptr.vmem [resolvable:$true] %s552
      %s554 = sshll.u32 %s10, 4
      %s555 = int_to_ptr.hbm [resolvable:$true] %s554
      %560 = dma.vmem_to_hbm [thread:$0]  %s553, 256, %s555, [#allocation4], 128, 128, 8
    $region69: #{tpu_custom_call.1} parent=1 // pred_fallthru
      _
    // Predicated region
    $region70: #{tpu_custom_call.1} parent=1 // pred_check
      _
    $region71: #{tpu_custom_call.1} parent=1 // pred_check_branch
      %562 = sbr.rel (0) target = $region73
    $region72: #{tpu_custom_call.1} parent=1 // pred_region
      %564 = vsyncadd [#allocation15], 0
      %s565 = sshll.u32 [#allocation14], 4
      %s566 = int_to_ptr.vmem [resolvable:$true] %s565
      %s567 = sshll.u32 %s11, 4
      %s568 = int_to_ptr.hbm [resolvable:$true] %s567
      %573 = dma.vmem_to_hbm [thread:$0]  %s566, 512, %s568, [#allocation15], 256, 256, 16
    $region73: #{tpu_custom_call.1} parent=1 // pred_fallthru
      _
    // Predicated region
    $region74: #{tpu_custom_call.1} parent=1 // pred_check
      _
    $region75: #{tpu_custom_call.1} parent=1 // pred_check_branch
      %575 = sbr.rel (0) target = $region77
    $region76: #{tpu_custom_call.1} parent=1 // pred_region
      %577 = dma.done [#allocation4], 256
    $region77: #{tpu_custom_call.1} parent=1 // pred_fallthru
      _
    // Predicated region
    $region78: #{tpu_custom_call.1} parent=1 // pred_check
      _
    $region79: #{tpu_custom_call.1} parent=1 // pred_check_branch
      %579 = sbr.rel (0) target = $region81
    $region80: #{tpu_custom_call.1} parent=1 // pred_region
      %581 = dma.done [#allocation15], 512
    $region81: #{tpu_custom_call.1} parent=1 // pred_fallthru
      _
    %582 = vsyncpa [#allocation3], 1
    %583 = vsyncpa [#allocation6], 1
    %584 = vsyncpa [#allocation9], 1
    %585 = vsyncpa [#allocation12], 1
    %586 = vsyncpa [#allocation4], 1
    %587 = vsyncpa [#allocation15], 1

// kernel: tpu_custom_call.1
$region0: #{tpu_custom_call.1}
  #allocation0 [shape = 'u32[]', space=smem, size = 0x4, offset = 0x4, fixed_abs, tag = 'smem constant byte address 0x4 - core index']
  #allocation1 [shape = 'u32[72,128]{1,0:T(1,128)}', space=vmem, size = 0x9000, scoped, tag = 'internal scratch']
  %s0 = inlined_call_operand.hbm [shape: bf16[16,128], index: 0, kind: input, shape index: {}]
  %s1 = inlined_call_operand.hbm [shape: bf16[128,128], index: 1, kind: input, shape index: {}]
  %s2 = inlined_call_operand.vmem [shape: f32[1,128], index: 2, kind: input, shape index: {}]
  %s3 = inlined_call_operand.hbm [shape: bf16[128,256], index: 3, kind: input, shape index: {}]
  %s4 = inlined_call_operand.vmem [shape: f32[1,256], index: 4, kind: input, shape index: {}]
  %s5 = inlined_call_operand.hbm [shape: f32[16,128], index: 5, kind: input, shape index: {}]
  %s6 = inlined_call_operand.hbm [shape: bf16[128,128], index: 6, kind: input, shape index: {}]
  %s7 = inlined_call_operand.vmem [shape: f32[1,128], index: 7, kind: input, shape index: {}]
  %s8 = inlined_call_operand.hbm [shape: bf16[128,128], index: 8, kind: input, shape index: {}]
  %s9 = inlined_call_operand.vmem [shape: f32[1,128], index: 9, kind: input, shape index: {}]
  %s10 = inlined_call_operand.hbm [shape: f32[16,128], index: 10, kind: output, shape index: {0}]
  %s11 = inlined_call_operand.hbm [shape: f32[16,256], index: 11, kind: output, shape index: {1}]
  %12 = xla_tuple %s10, %s11
  %s13 = sld [smem:[#allocation0]]
  $region82: #{tpu_custom_call.1} parent=0
    _
  %s15 = ssub.s32 1, %s13
  %s16 = scalar_select 0, %s15, %s13
  $region1: #{tpu_custom_call.1} parent=0
    #allocation2 [shape = 'u8[4096]{0}', space=vmem, size = 0x1000, scoped, tag = 'input window, operand 0, single buffered']
    #allocation3 [shape = 's32[1]{0}', space=sflag, size = 0x4, scoped, tag = 'scoped memory for tpu_custom_call.1']
    #allocation4 [shape = 's32[1]{0}', space=sflag, size = 0x4, scoped, tag = 'scoped memory for tpu_custom_call.1']
    #allocation5 [shape = 'u8[32768]{0}', space=vmem, size = 0x8000, scoped, tag = 'input window, operand 1, single buffered']
    #allocation6 [shape = 's32[1]{0}', space=sflag, size = 0x4, scoped, tag = 'scoped memory for tpu_custom_call.1']
    #allocation7 [shape = 'u8[65536]{0}', space=vmem, size = 0x10000, scoped, tag = 'input window, operand 3, single buffered']
    #allocation8 [shape = 'u8[8192]{0}', space=vmem, size = 0x2000, scoped, tag = 'input window, operand 5, single buffered']
    #allocation9 [shape = 's32[1]{0}', space=sflag, size = 0x4, scoped, tag = 'scoped memory for tpu_custom_call.1']
    #allocation10 [shape = 'u8[32768]{0}', space=vmem, size = 0x8000, scoped, tag = 'input window, operand 6, single buffered']
    #allocation11 [shape = 'u8[32768]{0}', space=vmem, size = 0x8000, scoped, tag = 'input window, operand 8, single buffered']
    #allocation12 [shape = 's32[1]{0}', space=sflag, size = 0x4, scoped, tag = 'scoped memory for tpu_custom_call.1']
    #allocation13 [shape = 'u8[8192]{0}', space=vmem, size = 0x2000, scoped, tag = 'output window, operand 0, single buffered']
    #allocation14 [shape = 'u8[16384]{0}', space=vmem, size = 0x4000, scoped, tag = 'output window, operand 1, single buffered']
    #allocation15 [shape = 's32[1]{0}', space=sflag, size = 0x4, scoped, tag = 'scoped memory for tpu_custom_call.1']
    %17 = vsyncpa [#allocation3], 0
    %18 = vsyncpa [#allocation6], 0
    %19 = vsyncpa [#allocation9], 0
    %20 = vsyncpa [#allocation12], 0
    %21 = vsyncpa [#allocation4], 0
    %22 = vsyncpa [#allocation15], 0
    // Predicated region
    $region2: #{tpu_custom_call.1} parent=1 // pred_check
      _
    $region3: #{tpu_custom_call.1} parent=1 // pred_check_branch
      %24 = sbr.rel (0) target = $region5
    $region4: #{tpu_custom_call.1} parent=1 // pred_region
      %26 = vsyncadd [#allocation3], 0
      %s27 = sshll.u32 %s0, 4
      %s28 = int_to_ptr.hbm [resolvable:$true] %s27
      %s29 = sshll.u32 [#allocation2], 4
      %s30 = int_to_ptr.vmem [resolvable:$true] %s29
      %35 = dma.hbm_to_vmem [thread:$0]  %s28, 128, %s30, [#allocation3], 64, 64, 4
    $region5: #{tpu_custom_call.1} parent=1 // pred_fallthru
      _
    // Predicated region
    $region6: #{tpu_custom_call.1} parent=1 // pred_check
      _
    $region7: #{tpu_custom_call.1} parent=1 // pred_check_branch
      %37 = sbr.rel (0) target = $region9
    $region8: #{tpu_custom_call.1} parent=1 // pred_region
      %39 = vsyncadd [#allocation6], 0
      %s40 = sshll.u32 %s1, 4
      %s41 = int_to_ptr.hbm [resolvable:$true] %s40
      %s42 = sshll.u32 [#allocation5], 4
      %s43 = int_to_ptr.vmem [resolvable:$true] %s42
      %48 = dma.hbm_to_vmem [thread:$0]  %s41, 1024, %s43, [#allocation6], 64, 64, 4
    $region9: #{tpu_custom_call.1} parent=1 // pred_fallthru
      _
    // Predicated region
    $region10: #{tpu_custom_call.1} parent=1 // pred_check
      _
    $region11: #{tpu_custom_call.1} parent=1 // pred_check_branch
      %50 = sbr.rel (0) target = $region13
    $region12: #{tpu_custom_call.1} parent=1 // pred_region
      _
    $region13: #{tpu_custom_call.1} parent=1 // pred_fallthru
      _
    // Predicated region
    $region14: #{tpu_custom_call.1} parent=1 // pred_check
      _
    $region15: #{tpu_custom_call.1} parent=1 // pred_check_branch
      %52 = sbr.rel (0) target = $region17
    $region16: #{tpu_custom_call.1} parent=1 // pred_region
      %54 = vsyncadd [#allocation6], 0
      %s55 = sshll.u32 %s3, 4
      %s56 = int_to_ptr.hbm [resolvable:$true] %s55
      %s57 = sshll.u32 [#allocation7], 4
      %s58 = int_to_ptr.vmem [resolvable:$true] %s57
      %63 = dma.hbm_to_vmem [thread:$0]  %s56, 2048, %s58, [#allocation6], 128, 128, 8
    $region17: #{tpu_custom_call.1} parent=1 // pred_fallthru
      _
    // Predicated region
    $region18: #{tpu_custom_call.1} parent=1 // pred_check
      _
    $region19: #{tpu_custom_call.1} parent=1 // pred_check_branch
      %65 = sbr.rel (0) target = $region21
    $region20: #{tpu_custom_call.1} parent=1 // pred_region
      _
    $region21: #{tpu_custom_call.1} parent=1 // pred_fallthru
      _
    // Predicated region
    $region22: #{tpu_custom_call.1} parent=1 // pred_check
      _
    $region23: #{tpu_custom_call.1} parent=1 // pred_check_branch
      %67 = sbr.rel (0) target = $region25
    $region24: #{tpu_custom_call.1} parent=1 // pred_region
      %69 = vsyncadd [#allocation9], 0
      %s70 = sshll.u32 %s5, 4
      %s71 = int_to_ptr.hbm [resolvable:$true] %s70
      %s72 = sshll.u32 [#allocation8], 4
      %s73 = int_to_ptr.vmem [resolvable:$true] %s72
      %78 = dma.hbm_to_vmem [thread:$0]  %s71, 256, %s73, [#allocation9], 128, 128, 8
    $region25: #{tpu_custom_call.1} parent=1 // pred_fallthru
      _
    // Predicated region
    $region26: #{tpu_custom_call.1} parent=1 // pred_check
      _
    $region27: #{tpu_custom_call.1} parent=1 // pred_check_branch
      %80 = sbr.rel (0) target = $region29
    $region28: #{tpu_custom_call.1} parent=1 // pred_region
      %82 = vsyncadd [#allocation9], 0
      %s83 = sshll.u32 %s6, 4
      %s84 = int_to_ptr.hbm [resolvable:$true] %s83
      %s85 = sshll.u32 [#allocation10], 4
      %s86 = int_to_ptr.vmem [resolvable:$true] %s85
      %91 = dma.hbm_to_vmem [thread:$0]  %s84, 1024, %s86, [#allocation9], 64, 64, 4
    $region29: #{tpu_custom_call.1} parent=1 // pred_fallthru
      _
    // Predicated region
    $region30: #{tpu_custom_call.1} parent=1 // pred_check
      _
    $region31: #{tpu_custom_call.1} parent=1 // pred_check_branch
      %93 = sbr.rel (0) target = $region33
    $region32: #{tpu_custom_call.1} parent=1 // pred_region
      _
    $region33: #{tpu_custom_call.1} parent=1 // pred_fallthru
      _
    // Predicated region
    $region34: #{tpu_custom_call.1} parent=1 // pred_check
      _
    $region35: #{tpu_custom_call.1} parent=1 // pred_check_branch
      %95 = sbr.rel (0) target = $region37
    $region36: #{tpu_custom_call.1} parent=1 // pred_region
      %97 = vsyncadd [#allocation12], 0
      %s98 = sshll.u32 %s8, 4
      %s99 = int_to_ptr.hbm [resolvable:$true] %s98
      %s100 = sshll.u32 [#allocation11], 4
      %s101 = int_to_ptr.vmem [resolvable:$true] %s100
      %106 = dma.hbm_to_vmem [thread:$0]  %s99, 1024, %s101, [#allocation12], 64, 64, 4
    $region37: #{tpu_custom_call.1} parent=1 // pred_fallthru
      _
    // Predicated region
    $region38: #{tpu_custom_call.1} parent=1 // pred_check
      _
    $region39: #{tpu_custom_call.1} parent=1 // pred_check_branch
      %108 = sbr.rel (0) target = $region41
    $region40: #{tpu_custom_call.1} parent=1 // pred_region
      _
    $region41: #{tpu_custom_call.1} parent=1 // pred_fallthru
      _
    // Predicated region
    $region42: #{tpu_custom_call.1} parent=1 // pred_check
      _
    $region43: #{tpu_custom_call.1} parent=1 // pred_check_branch
      %110 = sbr.rel (0) target = $region45
    $region44: #{tpu_custom_call.1} parent=1 // pred_region
      %112 = dma.done [#allocation3], 128
    $region45: #{tpu_custom_call.1} parent=1 // pred_fallthru
      _
    // Predicated region
    $region46: #{tpu_custom_call.1} parent=1 // pred_check
      _
    $region47: #{tpu_custom_call.1} parent=1 // pred_check_branch
      %114 = sbr.rel (0) target = $region49
    $region48: #{tpu_custom_call.1} parent=1 // pred_region
      %116 = dma.done [#allocation6], 1024
    $region49: #{tpu_custom_call.1} parent=1 // pred_fallthru
      _
    // Predicated region
    $region50: #{tpu_custom_call.1} parent=1 // pred_check
      _
    $region51: #{tpu_custom_call.1} parent=1 // pred_check_branch
      %118 = sbr.rel (0) target = $region53
    $region52: #{tpu_custom_call.1} parent=1 // pred_region
      %120 = dma.done [#allocation6], 2048
    $region53: #{tpu_custom_call.1} parent=1 // pred_fallthru
      _
    // Predicated region
    $region54: #{tpu_custom_call.1} parent=1 // pred_check
      _
    $region55: #{tpu_custom_call.1} parent=1 // pred_check_branch
      %122 = sbr.rel (0) target = $region57
    $region56: #{tpu_custom_call.1} parent=1 // pred_region
      %124 = dma.done [#allocation9], 256
    $region57: #{tpu_custom_call.1} parent=1 // pred_fallthru
      _
    // Predicated region
    $region58: #{tpu_custom_call.1} parent=1 // pred_check
      _
    $region59: #{tpu_custom_call.1} parent=1 // pred_check_branch
      %126 = sbr.rel (0) target = $region61
    $region60: #{tpu_custom_call.1} parent=1 // pred_region
      %128 = dma.done [#allocation9], 1024
    $region61: #{tpu_custom_call.1} parent=1 // pred_fallthru
      _
    // Predicated region
    $region62: #{tpu_custom_call.1} parent=1 // pred_check
      _
    $region63: #{tpu_custom_call.1} parent=1 // pred_check_branch
      %130 = sbr.rel (0) target = $region65
    $region64: #{tpu_custom_call.1} parent=1 // pred_region
      %132 = dma.done [#allocation12], 1024
    $region65: #{tpu_custom_call.1} parent=1 // pred_fallthru
      _
    %v133 = vld [vmem:[#allocation2] sm:$0xf]
    %v134 = vld [vmem:[#allocation2 + $0x4] sm:$0xf]
    %v135 = vld [vmem:[#allocation5] sm:$0xf]
    %v136 = vld [vmem:[#allocation5 + $0x4] sm:$0xf]
    %v137 = vld [vmem:[#allocation5 + $0x8] sm:$0xf]
    %v138 = vld [vmem:[#allocation5 + $0xc] sm:$0xf]
    %v139 = vld [vmem:[#allocation5 + $0x10] sm:$0xf]
    %v140 = vld [vmem:[#allocation5 + $0x14] sm:$0xf]
    %v141 = vld [vmem:[#allocation5 + $0x18] sm:$0xf]
    %v142 = vld [vmem:[#allocation5 + $0x1c] sm:$0xf]
    %v143 = vld [vmem:[#allocation5 + $0x20] sm:$0xf]
    %v144 = vld [vmem:[#allocation5 + $0x24] sm:$0xf]
    %v145 = vld [vmem:[#allocation5 + $0x28] sm:$0xf]
    %v146 = vld [vmem:[#allocation5 + $0x2c] sm:$0xf]
    %v147 = vld [vmem:[#allocation5 + $0x30] sm:$0xf]
    %v148 = vld [vmem:[#allocation5 + $0x34] sm:$0xf]
    %v149 = vld [vmem:[#allocation5 + $0x38] sm:$0xf]
    %v150 = vld [vmem:[#allocation5 + $0x3c] sm:$0xf]
    %v151 = vld [vmem:[%s2] sm:$0x1]
    %v153 = vperm.slane %v151, 0
    %v157 = vunpack.c.l.b16 %v133
    %v158 = vunpack.c.l.b16 %v134
    %v159 = vpack.c.b16 %v158, %v157
    %v177 = vunpack.c.l.b16 %v135
    %v178 = vunpack.c.l.b16 %v136
    %v179 = vunpack.c.l.b16 %v137
    %v180 = vunpack.c.l.b16 %v138
    %v181 = vunpack.c.l.b16 %v139
    %v182 = vunpack.c.l.b16 %v140
    %v183 = vunpack.c.l.b16 %v141
    %v184 = vunpack.c.l.b16 %v142
    %v185 = vunpack.c.l.b16 %v143
    %v186 = vunpack.c.l.b16 %v144
    %v187 = vunpack.c.l.b16 %v145
    %v188 = vunpack.c.l.b16 %v146
    %v189 = vunpack.c.l.b16 %v147
    %v190 = vunpack.c.l.b16 %v148
    %v191 = vunpack.c.l.b16 %v149
    %v192 = vunpack.c.l.b16 %v150
    %v193 = vpack.c.b16 %v178, %v177
    %v194 = vpack.c.b16 %v180, %v179
    %v195 = vpack.c.b16 %v182, %v181
    %v196 = vpack.c.b16 %v184, %v183
    %v197 = vpack.c.b16 %v186, %v185
    %v198 = vpack.c.b16 %v188, %v187
    %v199 = vpack.c.b16 %v190, %v189
    %v200 = vpack.c.b16 %v192, %v191
    %209 = vmatpush.bf16.msra.mxu0 %v200
    %210 = vmatpush.bf16.msra.mxu0 %v199
    %211 = vmatpush.bf16.msra.mxu0 %v198
    %212 = vmatpush.bf16.msra.mxu0 %v197
    %213 = vmatpush.bf16.msra.mxu0 %v196
    %214 = vmatpush.bf16.msra.mxu0 %v195
    %215 = vmatpush.bf16.msra.mxu0 %v194
    %216 = vmatpush.bf16.msra.mxu0 %v193
    %217 = vmatmul.bf16.gmra.mxu0 %v159
    %v218 = vpop.f32.mrf.mxu0
    %v219 = vadd.f32 %v153, %v218
    %v220 = vpop.f32.mrf.mxu0
    %v221 = vadd.f32 %v153, %v220
    %222 = vdwg.mxu0
    %v223 = vmax.f32 %v219, 0.0
    %v224 = vmax.f32 %v221, 0.0
    %v225 = vpack.c.bf16 %v224, %v223
    %v226 = vld [vmem:[#allocation7] sm:$0xff]
    %v227 = vld [vmem:[#allocation7 + $0x8] sm:$0xff]
    %v228 = vld [vmem:[#allocation7 + $0x10] sm:$0xff]
    %v229 = vld [vmem:[#allocation7 + $0x18] sm:$0xff]
    %v230 = vld [vmem:[#allocation7 + $0x20] sm:$0xff]
    %v231 = vld [vmem:[#allocation7 + $0x28] sm:$0xff]
    %v232 = vld [vmem:[#allocation7 + $0x30] sm:$0xff]
    %v233 = vld [vmem:[#allocation7 + $0x38] sm:$0xff]
    %v234 = vld [vmem:[#allocation7 + $0x40] sm:$0xff]
    %v235 = vld [vmem:[#allocation7 + $0x48] sm:$0xff]
    %v236 = vld [vmem:[#allocation7 + $0x50] sm:$0xff]
    %v237 = vld [vmem:[#allocation7 + $0x58] sm:$0xff]
    %v238 = vld [vmem:[#allocation7 + $0x60] sm:$0xff]
    %v239 = vld [vmem:[#allocation7 + $0x68] sm:$0xff]
    %v240 = vld [vmem:[#allocation7 + $0x70] sm:$0xff]
    %v241 = vld [vmem:[#allocation7 + $0x78] sm:$0xff]
    %v242 = vld [vmem:[%s4] sm:$0x3]
    %v244 = vperm.slane %v242, 0
    %v245 = vperm.slane %v242, 1
    %v264 = vunpack.c.l.b16 %v226
    %v265 = vunpack.c.h.b16 %v226
    %v266 = vunpack.c.l.b16 %v227
    %v267 = vunpack.c.h.b16 %v227
    %v268 = vunpack.c.l.b16 %v228
    %v269 = vunpack.c.h.b16 %v228
    %v270 = vunpack.c.l.b16 %v229
    %v271 = vunpack.c.h.b16 %v229
    %v272 = vunpack.c.l.b16 %v230
    %v273 = vunpack.c.h.b16 %v230
    %v274 = vunpack.c.l.b16 %v231
    %v275 = vunpack.c.h.b16 %v231
    %v276 = vunpack.c.l.b16 %v232
    %v277 = vunpack.c.h.b16 %v232
    %v278 = vunpack.c.l.b16 %v233
    %v279 = vunpack.c.h.b16 %v233
    %v280 = vunpack.c.l.b16 %v234
    %v281 = vunpack.c.h.b16 %v234
    %v282 = vunpack.c.l.b16 %v235
    %v283 = vunpack.c.h.b16 %v235
    %v284 = vunpack.c.l.b16 %v236
    %v285 = vunpack.c.h.b16 %v236
    %v286 = vunpack.c.l.b16 %v237
    %v287 = vunpack.c.h.b16 %v237
    %v288 = vunpack.c.l.b16 %v238
    %v289 = vunpack.c.h.b16 %v238
    %v290 = vunpack.c.l.b16 %v239
    %v291 = vunpack.c.h.b16 %v239
    %v292 = vunpack.c.l.b16 %v240
    %v293 = vunpack.c.h.b16 %v240
    %v294 = vunpack.c.l.b16 %v241
    %v295 = vunpack.c.h.b16 %v241
    %v296 = vpack.c.b16 %v266, %v264
    %v297 = vpack.c.b16 %v267, %v265
    %v298 = vpack.c.b16 %v270, %v268
    %v299 = vpack.c.b16 %v271, %v269
    %v300 = vpack.c.b16 %v274, %v272
    %v301 = vpack.c.b16 %v275, %v273
    %v302 = vpack.c.b16 %v278, %v276
    %v303 = vpack.c.b16 %v279, %v277
    %v304 = vpack.c.b16 %v282, %v280
    %v305 = vpack.c.b16 %v283, %v281
    %v306 = vpack.c.b16 %v286, %v284
    %v307 = vpack.c.b16 %v287, %v285
    %v308 = vpack.c.b16 %v290, %v288
    %v309 = vpack.c.b16 %v291, %v289
    %v310 = vpack.c.b16 %v294, %v292
    %v311 = vpack.c.b16 %v295, %v293
    %328 = vmatpush.bf16.msra.mxu0 %v310
    %329 = vmatpush.bf16.msra.mxu0 %v308
    %330 = vmatpush.bf16.msra.mxu0 %v306
    %331 = vmatpush.bf16.msra.mxu0 %v304
    %332 = vmatpush.bf16.msra.mxu0 %v302
    %333 = vmatpush.bf16.msra.mxu0 %v300
    %334 = vmatpush.bf16.msra.mxu0 %v298
    %335 = vmatpush.bf16.msra.mxu0 %v296
    %336 = vmatmul.bf16.gmra.mxu0 %v225
    %v337 = vpop.f32.mrf.mxu0
    %v338 = vadd.f32 %v244, %v337
    %v339 = vpop.f32.mrf.mxu0
    %v340 = vadd.f32 %v244, %v339
    %341 = vdwg.mxu0
    %342 = vmatpush.bf16.msra.mxu0 %v311
    %343 = vmatpush.bf16.msra.mxu0 %v309
    %344 = vmatpush.bf16.msra.mxu0 %v307
    %345 = vmatpush.bf16.msra.mxu0 %v305
    %346 = vmatpush.bf16.msra.mxu0 %v303
    %347 = vmatpush.bf16.msra.mxu0 %v301
    %348 = vmatpush.bf16.msra.mxu0 %v299
    %349 = vmatpush.bf16.msra.mxu0 %v297
    %350 = vmatmul.bf16.gmra.mxu0 %v225
    %v351 = vpop.f32.mrf.mxu0
    %v352 = vadd.f32 %v245, %v351
    %v353 = vpop.f32.mrf.mxu0
    %v354 = vadd.f32 %v245, %v353
    %355 = vdwg.mxu0
    %v356 = vmul.f32 %v352, 1.442695
    %v357 = vpow.pop %v356
    %v358 = vmul.f32 %v354, 1.442695
    %v359 = vpow.pop %v358
    %v360 = vld [vmem:[#allocation8] sm:$0xff]
    %v361 = vld [vmem:[#allocation8 + $0x8] sm:$0xff]
    %v362 = vmul.f32 %v357, %v360
    %v363 = vmul.f32 %v359, %v361
    %v364 = vadd.f32 %v338, %v362
    %v365 = vadd.f32 %v340, %v363
    %v366 = vpack.c.bf16 %v365, %v364
    %v367 = vld [vmem:[#allocation10] sm:$0xf]
    %v368 = vld [vmem:[#allocation10 + $0x4] sm:$0xf]
    %v369 = vld [vmem:[#allocation10 + $0x8] sm:$0xf]
    %v370 = vld [vmem:[#allocation10 + $0xc] sm:$0xf]
    %v371 = vld [vmem:[#allocation10 + $0x10] sm:$0xf]
    %v372 = vld [vmem:[#allocation10 + $0x14] sm:$0xf]
    %v373 = vld [vmem:[#allocation10 + $0x18] sm:$0xf]
    %v374 = vld [vmem:[#allocation10 + $0x1c] sm:$0xf]
    %v375 = vld [vmem:[#allocation10 + $0x20] sm:$0xf]
    %v376 = vld [vmem:[#allocation10 + $0x24] sm:$0xf]
    %v377 = vld [vmem:[#allocation10 + $0x28] sm:$0xf]
    %v378 = vld [vmem:[#allocation10 + $0x2c] sm:$0xf]
    %v379 = vld [vmem:[#allocation10 + $0x30] sm:$0xf]
    %v380 = vld [vmem:[#allocation10 + $0x34] sm:$0xf]
    %v381 = vld [vmem:[#allocation10 + $0x38] sm:$0xf]
    %v382 = vld [vmem:[#allocation10 + $0x3c] sm:$0xf]
    %v383 = vld [vmem:[%s7] sm:$0x1]
    %v385 = vperm.slane %v383, 0
    %v403 = vunpack.c.l.b16 %v367
    %v404 = vunpack.c.l.b16 %v368
    %v405 = vunpack.c.l.b16 %v369
    %v406 = vunpack.c.l.b16 %v370
    %v407 = vunpack.c.l.b16 %v371
    %v408 = vunpack.c.l.b16 %v372
    %v409 = vunpack.c.l.b16 %v373
    %v410 = vunpack.c.l.b16 %v374
    %v411 = vunpack.c.l.b16 %v375
    %v412 = vunpack.c.l.b16 %v376
    %v413 = vunpack.c.l.b16 %v377
    %v414 = vunpack.c.l.b16 %v378
    %v415 = vunpack.c.l.b16 %v379
    %v416 = vunpack.c.l.b16 %v380
    %v417 = vunpack.c.l.b16 %v381
    %v418 = vunpack.c.l.b16 %v382
    %v419 = vpack.c.b16 %v404, %v403
    %v420 = vpack.c.b16 %v406, %v405
    %v421 = vpack.c.b16 %v408, %v407
    %v422 = vpack.c.b16 %v410, %v409
    %v423 = vpack.c.b16 %v412, %v411
    %v424 = vpack.c.b16 %v414, %v413
    %v425 = vpack.c.b16 %v416, %v415
    %v426 = vpack.c.b16 %v418, %v417
    %435 = vmatpush.bf16.msra.mxu0 %v426
    %436 = vmatpush.bf16.msra.mxu0 %v425
    %437 = vmatpush.bf16.msra.mxu0 %v424
    %438 = vmatpush.bf16.msra.mxu0 %v423
    %439 = vmatpush.bf16.msra.mxu0 %v422
    %440 = vmatpush.bf16.msra.mxu0 %v421
    %441 = vmatpush.bf16.msra.mxu0 %v420
    %442 = vmatpush.bf16.msra.mxu0 %v419
    %443 = vmatmul.bf16.gmra.mxu0 %v366
    %v444 = vpop.f32.mrf.mxu0
    %v445 = vadd.f32 %v385, %v444
    %v446 = vpop.f32.mrf.mxu0
    %v447 = vadd.f32 %v385, %v446
    %448 = vdwg.mxu0
    %v449 = vmax.f32 %v445, 0.0
    %v450 = vmax.f32 %v447, 0.0
    %v451 = vpack.c.bf16 %v450, %v449
    %v452 = vld [vmem:[#allocation11] sm:$0xf]
    %v453 = vld [vmem:[#allocation11 + $0x4] sm:$0xf]
    %v454 = vld [vmem:[#allocation11 + $0x8] sm:$0xf]
    %v455 = vld [vmem:[#allocation11 + $0xc] sm:$0xf]
    %v456 = vld [vmem:[#allocation11 + $0x10] sm:$0xf]
    %v457 = vld [vmem:[#allocation11 + $0x14] sm:$0xf]
    %v458 = vld [vmem:[#allocation11 + $0x18] sm:$0xf]
    %v459 = vld [vmem:[#allocation11 + $0x1c] sm:$0xf]
    %v460 = vld [vmem:[#allocation11 + $0x20] sm:$0xf]
    %v461 = vld [vmem:[#allocation11 + $0x24] sm:$0xf]
    %v462 = vld [vmem:[#allocation11 + $0x28] sm:$0xf]
    %v463 = vld [vmem:[#allocation11 + $0x2c] sm:$0xf]
    %v464 = vld [vmem:[#allocation11 + $0x30] sm:$0xf]
    %v465 = vld [vmem:[#allocation11 + $0x34] sm:$0xf]
    %v466 = vld [vmem:[#allocation11 + $0x38] sm:$0xf]
    %v467 = vld [vmem:[#allocation11 + $0x3c] sm:$0xf]
    %v468 = vld [vmem:[%s9] sm:$0x1]
    %v470 = vperm.slane %v468, 0
    %v488 = vunpack.c.l.b16 %v452
    %v489 = vunpack.c.l.b16 %v453
    %v490 = vunpack.c.l.b16 %v454
    %v491 = vunpack.c.l.b16 %v455
    %v492 = vunpack.c.l.b16 %v456
    %v493 = vunpack.c.l.b16 %v457
    %v494 = vunpack.c.l.b16 %v458
    %v495 = vunpack.c.l.b16 %v459
    %v496 = vunpack.c.l.b16 %v460
    %v497 = vunpack.c.l.b16 %v461
    %v498 = vunpack.c.l.b16 %v462
    %v499 = vunpack.c.l.b16 %v463
    %v500 = vunpack.c.l.b16 %v464
    %v501 = vunpack.c.l.b16 %v465
    %v502 = vunpack.c.l.b16 %v466
    %v503 = vunpack.c.l.b16 %v467
    %v504 = vpack.c.b16 %v489, %v488
    %v505 = vpack.c.b16 %v491, %v490
    %v506 = vpack.c.b16 %v493, %v492
    %v507 = vpack.c.b16 %v495, %v494
    %v508 = vpack.c.b16 %v497, %v496
    %v509 = vpack.c.b16 %v499, %v498
    %v510 = vpack.c.b16 %v501, %v500
    %v511 = vpack.c.b16 %v503, %v502
    %520 = vmatpush.bf16.msra.mxu0 %v511
    %521 = vmatpush.bf16.msra.mxu0 %v510
    %522 = vmatpush.bf16.msra.mxu0 %v509
    %523 = vmatpush.bf16.msra.mxu0 %v508
    %524 = vmatpush.bf16.msra.mxu0 %v507
    %525 = vmatpush.bf16.msra.mxu0 %v506
    %526 = vmatpush.bf16.msra.mxu0 %v505
    %527 = vmatpush.bf16.msra.mxu0 %v504
    %528 = vmatmul.bf16.gmra.mxu0 %v451
    %v529 = vpop.f32.mrf.mxu0
    %v530 = vadd.f32 %v470, %v529
    %v531 = vpop.f32.mrf.mxu0
    %v532 = vadd.f32 %v470, %v531
    %533 = vdwg.mxu0
    %v534 = vmul.f32 %v530, 0.5
    %v535 = vmul.f32 %v532, 0.5
    %v536 = vtanh.pop %v534
    %v537 = vtanh.pop %v535
    %v538 = vadd.f32 %v536, 1.0
    %v539 = vadd.f32 %v537, 1.0
    %v540 = vmul.f32 %v538, 0.5
    %v541 = vmul.f32 %v539, 0.5
    %542 = vst [vmem:[#allocation13] sm:$0xff] %v540
    %543 = vst [vmem:[#allocation13 + $0x8] sm:$0xff] %v541
    %544 = vst [vmem:[#allocation14] sm:$0xff] %v338
    %545 = vst [vmem:[#allocation14 + $0x10] sm:$0xff] %v340
    %546 = vst [vmem:[#allocation14 + $0x8] sm:$0xff] %v357
    %547 = vst [vmem:[#allocation14 + $0x18] sm:$0xff] %v359
    // Predicated region
    $region66: #{tpu_custom_call.1} parent=1 // pred_check
      _
    $region67: #{tpu_custom_call.1} parent=1 // pred_check_branch
      %549 = sbr.rel (0) target = $region69
    $region68: #{tpu_custom_call.1} parent=1 // pred_region
      %551 = vsyncadd [#allocation4], 0
      %s552 = sshll.u32 [#allocation13], 4
      %s553 = int_to_ptr.vmem [resolvable:$true] %s552
      %s554 = sshll.u32 %s10, 4
      %s555 = int_to_ptr.hbm [resolvable:$true] %s554
      %560 = dma.vmem_to_hbm [thread:$0]  %s553, 256, %s555, [#allocation4], 128, 128, 8
    $region69: #{tpu_custom_call.1} parent=1 // pred_fallthru
      _
    // Predicated region
    $region70: #{tpu_custom_call.1} parent=1 // pred_check
      _
    $region71: #{tpu_custom_call.1} parent=1 // pred_check_branch
      %562 = sbr.rel (0) target = $region73
    $region72: #{tpu_custom_call.1} parent=1 // pred_region
      %564 = vsyncadd [#allocation15], 0
      %s565 = sshll.u32 [#allocation14], 4
      %s566 = int_to_ptr.vmem [resolvable:$true] %s565
      %s567 = sshll.u32 %s11, 4
      %s568 = int_to_ptr.hbm [resolvable:$true] %s567
      %573 = dma.vmem_to_hbm [thread:$0]  %s566, 512, %s568, [#allocation15], 256, 256, 16
    $region73: #{tpu_custom_call.1} parent=1 // pred_fallthru
      _
    // Predicated region
    $region74: #{tpu_custom_call.1} parent=1 // pred_check
      _
    $region75: #{tpu_custom_call.1} parent=1 // pred_check_branch
      %575 = sbr.rel (0) target = $region77
    $region76: #{tpu_custom_call.1} parent=1 // pred_region
      %577 = dma.done [#allocation4], 256
    $region77: #{tpu_custom_call.1} parent=1 // pred_fallthru
      _
    // Predicated region
    $region78: #{tpu_custom_call.1} parent=1 // pred_check
      _
    $region79: #{tpu_custom_call.1} parent=1 // pred_check_branch
      %579 = sbr.rel (0) target = $region81
    $region80: #{tpu_custom_call.1} parent=1 // pred_region
      %581 = dma.done [#allocation15], 512
    $region81: #{tpu_custom_call.1} parent=1 // pred_fallthru
      _
    %582 = vsyncpa [#allocation3], 1
    %583 = vsyncpa [#allocation6], 1
    %584 = vsyncpa [#allocation9], 1
    %585 = vsyncpa [#allocation12], 1
    %586 = vsyncpa [#allocation4], 1
    %587 = vsyncpa [#allocation15], 1

</llo_original>
